<compile_context>
chip_gen: v6e
topology: v6e:2x2x1
jax: 0.10.0
libtpu: 0.0.40
codegen_flags: <defaults>
</compile_context>

<pallas_src>
import functools
import math

import jax
import jax.numpy as jnp
from jax import lax
from jax.experimental import pallas as pl
from jax.experimental.pallas import tpu as pltpu


def _round_up(x, m):
    return (x + m - 1) // m * m


def _vmem_limit_bytes(working_set_bytes):
    """Generation-aware scoped-VMEM request (v5e/v6e: 128 MiB physical, v7x: 64 MiB)."""
    cap = 64 * 1024 * 1024
    try:
        info = pltpu.get_tpu_info()
        cap = int(getattr(info, "vmem_capacity_bytes", cap))
    except Exception:
        pass
    want = max(4 * int(working_set_bytes), 32 * 1024 * 1024)
    return int(min(want, cap // 2))


def _conv_taps_kernel(x_ref, w_ref, b_ref, o_ref, *, ksize, w_pitch, tile_m,
                      n_m_tiles, relu):
    """stride-1 conv: K*K in-VMEM tap slices, each a (Cout_p, Cin_p) @ (Cin_p, TM) dot.

    x_ref : (Cin_p, Lpad)         one image, channel-major, spatially padded, flattened
    w_ref : (K*K, Cout_p, Cin_p)  per-tap weight matrices
    b_ref : (Cout_p, 1)           f32 bias
    o_ref : (Cout_p, Mimg_pad)    lane-dense output (output pixels on the 128-lane axis)
    """
    cout_p = o_ref.shape[0]
    # Bias folded into the accumulator init (hoisted broadcast; reused by every tile).
    bias = jnp.broadcast_to(b_ref[...], (cout_p, tile_m)).astype(jnp.float32)
    for mt in range(n_m_tiles):  # static unroll; n_m_tiles is small for these shapes
        m0 = mt * tile_m
        acc = bias
        for kh in range(ksize):
            for kw in range(ksize):
                off = m0 + kh * w_pitch + kw          # contiguous shifted tap slab
                acc = acc + jnp.dot(w_ref[kh * ksize + kw],
                                    x_ref[:, off:off + tile_m],
                                    preferred_element_type=jnp.float32)
        if relu:
            acc = jnp.maximum(acc, 0.0)
        o_ref[:, m0:m0 + tile_m] = acc.astype(o_ref.dtype)


def _matmul_bias_relu_kernel(x_ref, w_ref, b_ref, o_ref, *, relu):
    """Single-K-block (Cout_p, Kdim_p) @ (Kdim_p, TM) + bias (+ ReLU).

    No k grid axis, no scratch accumulator, no pl.when — specialized per review.
    """
    acc = jnp.dot(w_ref[...], x_ref[...], preferred_element_type=jnp.float32)
    acc = acc + b_ref[...]
    if relu:
        acc = jnp.maximum(acc, 0.0)
    o_ref[...] = acc.astype(o_ref.dtype)


def basic_conv_forward(x_nchw, weight, bias=None, *, stride=1, relu=True):
    """Forward of BasicConv(in_c, out_c, k, stride, bias=True, norm=False,
    relu=<flag>, transpose=False).

    x_nchw : (N, Cin, H, W)      -- PyTorch layout
    weight : (Cout, Cin, K, K)   -- PyTorch layout
    bias   : (Cout,) or None
    returns: (N, Cout, Ho, Wo)   -- PyTorch layout
    """
    N, Cin, H, W = x_nchw.shape
    Cout, Cin_w, K, K2 = weight.shape
    assert Cin == Cin_w and K == K2
    pad = K // 2
    Ho = (H + 2 * pad - K) // stride + 1
    Wo = (W + 2 * pad - K) // stride + 1
    if bias is None:
        bias = jnp.zeros((Cout,), jnp.float32)

    out_dtype = x_nchw.dtype
    itemsize = jnp.dtype(out_dtype).itemsize
    Cout_p = _round_up(Cout, 8)                       # sublane granule only (no 128 pad)
    b_p = jnp.pad(bias.astype(jnp.float32), (0, Cout_p - Cout)).reshape(Cout_p, 1)

    if stride == 1:
        # ---------------- fused path: taps formed in VMEM, no HBM im2col -------------
        Cin_p = _round_up(Cin, 8)
        Hp, Wp = H + 2 * pad, W + 2 * pad
        Mimg = Ho * Wp                                # padded-width pitch -> taps are
        Mimg_128 = _round_up(Mimg, 128)               # contiguous shifts of the flat image
        TM = Mimg_128 if Mimg_128 <= 1024 else 512
        Mimg_pad = _round_up(Mimg, TM)
        n_m_tiles = Mimg_pad // TM
        Lpad = _round_up(Mimg_pad + (K - 1) * (Wp + 1), 128)

        xp = jnp.pad(x_nchw, ((0, 0), (0, Cin_p - Cin), (pad, pad), (pad, pad)))
        xf = xp.reshape(N, Cin_p, Hp * Wp)
        xf = jnp.pad(xf, ((0, 0), (0, 0), (0, Lpad - Hp * Wp)))

        # w3[kh*K+kw, co, ci] = weight[co, ci, kh, kw]
        w3 = jnp.transpose(weight, (2, 3, 0, 1)).reshape(K * K, Cout, Cin)
        w3 = jnp.pad(w3, ((0, 0), (0, Cout_p - Cout), (0, Cin_p - Cin))).astype(out_dtype)

        working_set = 2 * (Cin_p * Lpad * itemsize
                           + K * K * Cout_p * Cin_p * itemsize
                           + Cout_p * 4
                           + Cout_p * Mimg_pad * itemsize)

        kernel = functools.partial(_conv_taps_kernel, ksize=K, w_pitch=Wp,
                                   tile_m=TM, n_m_tiles=n_m_tiles, relu=relu)

        out_flat = pl.pallas_call(
            kernel,
            out_shape=jax.ShapeDtypeStruct((N, Cout_p, Mimg_pad), out_dtype),
            grid_spec=pltpu.PrefetchScalarGridSpec(
                num_scalar_prefetch=0,
                grid=(N,),
                in_specs=[
                    pl.BlockSpec((None, Cin_p, Lpad), lambda n: (n, 0, 0)),
                    pl.BlockSpec((K * K, Cout_p, Cin_p), lambda n: (0, 0, 0)),
                    pl.BlockSpec((Cout_p, 1), lambda n: (0, 0)),
                ],
                out_specs=pl.BlockSpec((None, Cout_p, Mimg_pad), lambda n: (n, 0, 0)),
            ),
            compiler_params=pltpu.CompilerParams(
                dimension_semantics=("parallel",),
                vmem_limit_bytes=_vmem_limit_bytes(working_set)),
            cost_estimate=pl.CostEstimate(
                flops=2 * N * Mimg_pad * Cin_p * Cout_p * K * K,
                transcendentals=0,
                bytes_accessed=int(N * Cin_p * Lpad * itemsize
                                   + K * K * Cout_p * Cin_p * itemsize
                                   + Cout_p * 4
                                   + N * Cout_p * Mimg_pad * itemsize)),
        )(xf, w3, b_p)

        out = out_flat[:, :Cout, :Ho * Wp].reshape(N, Cout, Ho, Wp)[:, :, :, :Wo]
        return out

    # ---------------- stride != 1 fallback: lane-dense single-block matmul -----------
    xpad = jnp.pad(x_nchw, ((0, 0), (0, 0), (pad, pad), (pad, pad)))
    taps = []
    for kh in range(K):                               # static loop, K small
        for kw in range(K):
            taps.append(xpad[:, :, kh:kh + (Ho - 1) * stride + 1:stride,
                                   kw:kw + (Wo - 1) * stride + 1:stride])
    pat = jnp.stack(taps, axis=0)                     # (K*K, N, Cin, Ho, Wo)
    pat = jnp.transpose(pat, (2, 0, 1, 3, 4))         # (Cin, K*K, N, Ho, Wo)
    Kdim = Cin * K * K
    M = N * Ho * Wo
    patches_T = pat.reshape(Kdim, M)                  # rows (ci, kh, kw); cols (n, oh, ow)

    Kdim_p = _round_up(Kdim, 8)                       # sublane granule, NOT 128
    Mp = _round_up(M, 128)
    TM = 512 if Mp % 512 == 0 else (256 if Mp % 256 == 0 else 128)
    patches_T = jnp.pad(patches_T, ((0, Kdim_p - Kdim), (0, Mp - M)))
    w2 = jnp.pad(weight.reshape(Cout, Kdim),
                 ((0, Cout_p - Cout), (0, Kdim_p - Kdim))).astype(out_dtype)

    working_set = 2 * (Kdim_p * TM * itemsize + Cout_p * Kdim_p * itemsize
                       + Cout_p * 4 + Cout_p * TM * itemsize)

    kernel = functools.partial(_matmul_bias_relu_kernel, relu=relu)

    out_mat = pl.pallas_call(
        kernel,
        out_shape=jax.ShapeDtypeStruct((Cout_p, Mp), out_dtype),
        grid_spec=pltpu.PrefetchScalarGridSpec(
            num_scalar_prefetch=0,
            grid=(Mp // TM,),
            in_specs=[
                pl.BlockSpec((Kdim_p, TM), lambda m: (0, m)),
                pl.BlockSpec((Cout_p, Kdim_p), lambda m: (0, 0)),
                pl.BlockSpec((Cout_p, 1), lambda m: (0, 0)),
            ],
            out_specs=pl.BlockSpec((Cout_p, TM), lambda m: (0, m)),
        ),
        compiler_params=pltpu.CompilerParams(
            dimension_semantics=("parallel",),
            vmem_limit_bytes=_vmem_limit_bytes(working_set)),
        cost_estimate=pl.CostEstimate(
            flops=2 * Mp * Kdim_p * Cout_p,
            transcendentals=0,
            bytes_accessed=int(Kdim_p * Mp * itemsize + Cout_p * Kdim_p * itemsize
                               + Cout_p * 4 + Cout_p * Mp * itemsize)),
    )(patches_T, w2, b_p)

    out = out_mat[:Cout, :M].reshape(Cout, N, Ho, Wo)
    return jnp.transpose(out, (1, 0, 2, 3))


if __name__ == "__main__":
    # BasicConv(in_channel=4, out_channel=8, kernel_size=3, stride=...)
    N, Cin, H, W = 2, 4, 16, 16
    Cout, K = 8, 3

    key = jax.random.PRNGKey(0)
    kx, kw, kb = jax.random.split(key, 3)
    x = jax.random.normal(kx, (N, Cin, H, W), dtype=jnp.float32)
    fan_in = Cin * K * K
    bound = 1.0 / math.sqrt(fan_in)
    weight = jax.random.uniform(kw, (Cout, Cin, K, K), jnp.float32, -bound, bound)
    bias = jax.random.uniform(kb, (Cout,), jnp.float32, -bound, bound)

    for stride in (1, 2):
        fwd = jax.jit(functools.partial(basic_conv_forward, stride=stride, relu=True))
        out = jax.block_until_ready(fwd(x, weight, bias))

        # reference check against XLA conv (same semantics as nn.Conv2d + bias + ReLU)
        ref = lax.conv_general_dilated(
            x, weight, window_strides=(stride, stride),
            padding=[(K // 2, K // 2), (K // 2, K // 2)],
            dimension_numbers=("NCHW", "OIHW", "NCHW"))
        ref = jnp.maximum(ref + bias[None, :, None, None], 0.0)
        assert out.shape == ref.shape, (out.shape, ref.shape)
        assert jnp.allclose(out, ref, atol=1e-4, rtol=1e-4), f"mismatch at stride={stride}"

    print("KERNEL_OK")
</pallas_src>

<mosaic_0001>
module attributes {stable_mosaic.version = 11 : i64} {
  func.func @_conv_taps_kernel(%arg0: i32, %arg1: memref<1x8x512xf32, #tpu.memory_space<vmem>>, %arg2: memref<9x8x8xf32, #tpu.memory_space<vmem>>, %arg3: memref<8x1xf32, #tpu.memory_space<vmem>>, %arg4: memref<1x8x384xf32, #tpu.memory_space<vmem>>) attributes {dimension_semantics = [#tpu.dimension_semantics<parallel>], iteration_bounds = array<i64: 2>, scalar_prefetch = 0 : i64, scratch_operands = 0 : i64, tpu.core_type = #tpu.core_type<tc>, window_params = [{transform_indices = @transform_0, window_bounds = array<i64: 1, 8, 512>}, {pipeline_mode = #tpu.pipeline_mode<synchronous>, transform_indices = @transform_1, window_bounds = array<i64: 9, 8, 8>}, {pipeline_mode = #tpu.pipeline_mode<synchronous>, transform_indices = @transform_2, window_bounds = array<i64: 8, 1>}, {transform_indices = @transform_3, window_bounds = array<i64: 1, 8, 384>}]} {
    %c0 = arith.constant 0 : index
    %c0_0 = arith.constant 0 : index
    %0 = vector.load %arg3[%c0, %c0_0] : memref<8x1xf32, #tpu.memory_space<vmem>>, vector<8x1xf32>
    %1 = vector.shape_cast %0 : vector<8x1xf32> to vector<8x1xf32>
    %2 = vector.broadcast %1 : vector<8x1xf32> to vector<8x384xf32>
    %c0_1 = arith.constant 0 : index
    %c0_2 = arith.constant 0 : index
    %c0_3 = arith.constant 0 : index
    %3 = vector.load %arg2[%c0_1, %c0_2, %c0_3] : memref<9x8x8xf32, #tpu.memory_space<vmem>>, vector<1x8x8xf32>
    %4 = vector.shape_cast %3 : vector<1x8x8xf32> to vector<8x8xf32>
    %c0_4 = arith.constant 0 : index
    %c0_5 = arith.constant 0 : index
    %c0_6 = arith.constant 0 : index
    %5 = vector.load %arg1[%c0_4, %c0_5, %c0_6] : memref<1x8x512xf32, #tpu.memory_space<vmem>>, vector<1x8x384xf32>
    %6 = vector.shape_cast %5 : vector<1x8x384xf32> to vector<8x384xf32>
    %cst = arith.constant dense<0.000000e+00> : vector<8x384xf32>
    %7 = tpu.matmul %4, %6, %cst {dimension_numbers = #tpu.dot_dimension_numbers<[1], [0], [0], [1], [0, 0, 1, 1], [], []>} : vector<8x8xf32>, vector<8x384xf32>, vector<8x384xf32> -> vector<8x384xf32>
    %8 = arith.addf %2, %7 : vector<8x384xf32>
    %c1 = arith.constant 1 : index
    %c0_7 = arith.constant 0 : index
    %c0_8 = arith.constant 0 : index
    %9 = vector.load %arg2[%c1, %c0_7, %c0_8] : memref<9x8x8xf32, #tpu.memory_space<vmem>>, vector<1x8x8xf32>
    %10 = vector.shape_cast %9 : vector<1x8x8xf32> to vector<8x8xf32>
    %c0_9 = arith.constant 0 : index
    %c0_10 = arith.constant 0 : index
    %c1_11 = arith.constant 1 : index
    %11 = vector.load %arg1[%c0_9, %c0_10, %c1_11] : memref<1x8x512xf32, #tpu.memory_space<vmem>>, vector<1x8x384xf32>
    %12 = vector.shape_cast %11 : vector<1x8x384xf32> to vector<8x384xf32>
    %cst_12 = arith.constant dense<0.000000e+00> : vector<8x384xf32>
    %13 = tpu.matmul %10, %12, %cst_12 {dimension_numbers = #tpu.dot_dimension_numbers<[1], [0], [0], [1], [0, 0, 1, 1], [], []>} : vector<8x8xf32>, vector<8x384xf32>, vector<8x384xf32> -> vector<8x384xf32>
    %14 = arith.addf %8, %13 : vector<8x384xf32>
    %c2 = arith.constant 2 : index
    %c0_13 = arith.constant 0 : index
    %c0_14 = arith.constant 0 : index
    %15 = vector.load %arg2[%c2, %c0_13, %c0_14] : memref<9x8x8xf32, #tpu.memory_space<vmem>>, vector<1x8x8xf32>
    %16 = vector.shape_cast %15 : vector<1x8x8xf32> to vector<8x8xf32>
    %c0_15 = arith.constant 0 : index
    %c0_16 = arith.constant 0 : index
    %c2_17 = arith.constant 2 : index
    %17 = vector.load %arg1[%c0_15, %c0_16, %c2_17] : memref<1x8x512xf32, #tpu.memory_space<vmem>>, vector<1x8x384xf32>
    %18 = vector.shape_cast %17 : vector<1x8x384xf32> to vector<8x384xf32>
    %cst_18 = arith.constant dense<0.000000e+00> : vector<8x384xf32>
    %19 = tpu.matmul %16, %18, %cst_18 {dimension_numbers = #tpu.dot_dimension_numbers<[1], [0], [0], [1], [0, 0, 1, 1], [], []>} : vector<8x8xf32>, vector<8x384xf32>, vector<8x384xf32> -> vector<8x384xf32>
    %20 = arith.addf %14, %19 : vector<8x384xf32>
    %c3 = arith.constant 3 : index
    %c0_19 = arith.constant 0 : index
    %c0_20 = arith.constant 0 : index
    %21 = vector.load %arg2[%c3, %c0_19, %c0_20] : memref<9x8x8xf32, #tpu.memory_space<vmem>>, vector<1x8x8xf32>
    %22 = vector.shape_cast %21 : vector<1x8x8xf32> to vector<8x8xf32>
    %c0_21 = arith.constant 0 : index
    %c0_22 = arith.constant 0 : index
    %c18 = arith.constant 18 : index
    %23 = vector.load %arg1[%c0_21, %c0_22, %c18] : memref<1x8x512xf32, #tpu.memory_space<vmem>>, vector<1x8x384xf32>
    %24 = vector.shape_cast %23 : vector<1x8x384xf32> to vector<8x384xf32>
    %cst_23 = arith.constant dense<0.000000e+00> : vector<8x384xf32>
    %25 = tpu.matmul %22, %24, %cst_23 {dimension_numbers = #tpu.dot_dimension_numbers<[1], [0], [0], [1], [0, 0, 1, 1], [], []>} : vector<8x8xf32>, vector<8x384xf32>, vector<8x384xf32> -> vector<8x384xf32>
    %26 = arith.addf %20, %25 : vector<8x384xf32>
    %c4 = arith.constant 4 : index
    %c0_24 = arith.constant 0 : index
    %c0_25 = arith.constant 0 : index
    %27 = vector.load %arg2[%c4, %c0_24, %c0_25] : memref<9x8x8xf32, #tpu.memory_space<vmem>>, vector<1x8x8xf32>
    %28 = vector.shape_cast %27 : vector<1x8x8xf32> to vector<8x8xf32>
    %c0_26 = arith.constant 0 : index
    %c0_27 = arith.constant 0 : index
    %c19 = arith.constant 19 : index
    %29 = vector.load %arg1[%c0_26, %c0_27, %c19] : memref<1x8x512xf32, #tpu.memory_space<vmem>>, vector<1x8x384xf32>
    %30 = vector.shape_cast %29 : vector<1x8x384xf32> to vector<8x384xf32>
    %cst_28 = arith.constant dense<0.000000e+00> : vector<8x384xf32>
    %31 = tpu.matmul %28, %30, %cst_28 {dimension_numbers = #tpu.dot_dimension_numbers<[1], [0], [0], [1], [0, 0, 1, 1], [], []>} : vector<8x8xf32>, vector<8x384xf32>, vector<8x384xf32> -> vector<8x384xf32>
    %32 = arith.addf %26, %31 : vector<8x384xf32>
    %c5 = arith.constant 5 : index
    %c0_29 = arith.constant 0 : index
    %c0_30 = arith.constant 0 : index
    %33 = vector.load %arg2[%c5, %c0_29, %c0_30] : memref<9x8x8xf32, #tpu.memory_space<vmem>>, vector<1x8x8xf32>
    %34 = vector.shape_cast %33 : vector<1x8x8xf32> to vector<8x8xf32>
    %c0_31 = arith.constant 0 : index
    %c0_32 = arith.constant 0 : index
    %c20 = arith.constant 20 : index
    %35 = vector.load %arg1[%c0_31, %c0_32, %c20] : memref<1x8x512xf32, #tpu.memory_space<vmem>>, vector<1x8x384xf32>
    %36 = vector.shape_cast %35 : vector<1x8x384xf32> to vector<8x384xf32>
    %cst_33 = arith.constant dense<0.000000e+00> : vector<8x384xf32>
    %37 = tpu.matmul %34, %36, %cst_33 {dimension_numbers = #tpu.dot_dimension_numbers<[1], [0], [0], [1], [0, 0, 1, 1], [], []>} : vector<8x8xf32>, vector<8x384xf32>, vector<8x384xf32> -> vector<8x384xf32>
    %38 = arith.addf %32, %37 : vector<8x384xf32>
    %c6 = arith.constant 6 : index
    %c0_34 = arith.constant 0 : index
    %c0_35 = arith.constant 0 : index
    %39 = vector.load %arg2[%c6, %c0_34, %c0_35] : memref<9x8x8xf32, #tpu.memory_space<vmem>>, vector<1x8x8xf32>
    %40 = vector.shape_cast %39 : vector<1x8x8xf32> to vector<8x8xf32>
    %c0_36 = arith.constant 0 : index
    %c0_37 = arith.constant 0 : index
    %c36 = arith.constant 36 : index
    %41 = vector.load %arg1[%c0_36, %c0_37, %c36] : memref<1x8x512xf32, #tpu.memory_space<vmem>>, vector<1x8x384xf32>
    %42 = vector.shape_cast %41 : vector<1x8x384xf32> to vector<8x384xf32>
    %cst_38 = arith.constant dense<0.000000e+00> : vector<8x384xf32>
    %43 = tpu.matmul %40, %42, %cst_38 {dimension_numbers = #tpu.dot_dimension_numbers<[1], [0], [0], [1], [0, 0, 1, 1], [], []>} : vector<8x8xf32>, vector<8x384xf32>, vector<8x384xf32> -> vector<8x384xf32>
    %44 = arith.addf %38, %43 : vector<8x384xf32>
    %c7 = arith.constant 7 : index
    %c0_39 = arith.constant 0 : index
    %c0_40 = arith.constant 0 : index
    %45 = vector.load %arg2[%c7, %c0_39, %c0_40] : memref<9x8x8xf32, #tpu.memory_space<vmem>>, vector<1x8x8xf32>
    %46 = vector.shape_cast %45 : vector<1x8x8xf32> to vector<8x8xf32>
    %c0_41 = arith.constant 0 : index
    %c0_42 = arith.constant 0 : index
    %c37 = arith.constant 37 : index
    %47 = vector.load %arg1[%c0_41, %c0_42, %c37] : memref<1x8x512xf32, #tpu.memory_space<vmem>>, vector<1x8x384xf32>
    %48 = vector.shape_cast %47 : vector<1x8x384xf32> to vector<8x384xf32>
    %cst_43 = arith.constant dense<0.000000e+00> : vector<8x384xf32>
    %49 = tpu.matmul %46, %48, %cst_43 {dimension_numbers = #tpu.dot_dimension_numbers<[1], [0], [0], [1], [0, 0, 1, 1], [], []>} : vector<8x8xf32>, vector<8x384xf32>, vector<8x384xf32> -> vector<8x384xf32>
    %50 = arith.addf %44, %49 : vector<8x384xf32>
    %c8 = arith.constant 8 : index
    %c0_44 = arith.constant 0 : index
    %c0_45 = arith.constant 0 : index
    %51 = vector.load %arg2[%c8, %c0_44, %c0_45] : memref<9x8x8xf32, #tpu.memory_space<vmem>>, vector<1x8x8xf32>
    %52 = vector.shape_cast %51 : vector<1x8x8xf32> to vector<8x8xf32>
    %c0_46 = arith.constant 0 : index
    %c0_47 = arith.constant 0 : index
    %c38 = arith.constant 38 : index
    %53 = vector.load %arg1[%c0_46, %c0_47, %c38] : memref<1x8x512xf32, #tpu.memory_space<vmem>>, vector<1x8x384xf32>
    %54 = vector.shape_cast %53 : vector<1x8x384xf32> to vector<8x384xf32>
    %cst_48 = arith.constant dense<0.000000e+00> : vector<8x384xf32>
    %55 = tpu.matmul %52, %54, %cst_48 {dimension_numbers = #tpu.dot_dimension_numbers<[1], [0], [0], [1], [0, 0, 1, 1], [], []>} : vector<8x8xf32>, vector<8x384xf32>, vector<8x384xf32> -> vector<8x384xf32>
    %56 = arith.addf %50, %55 : vector<8x384xf32>
    %cst_49 = arith.constant 0.000000e+00 : f32
    %57 = vector.broadcast %cst_49 : f32 to vector<8x384xf32>
    %58 = arith.maximumf %56, %57 : vector<8x384xf32>
    %c0_50 = arith.constant 0 : index
    %c0_51 = arith.constant 0 : index
    %c0_52 = arith.constant 0 : index
    %59 = vector.load %arg4[%c0_50, %c0_51, %c0_52] : memref<1x8x384xf32, #tpu.memory_space<vmem>>, vector<1x8x384xf32>
    %60 = vector.shape_cast %59 : vector<1x8x384xf32> to vector<8x384xf32>
    %61 = vector.shape_cast %58 : vector<8x384xf32> to vector<1x8x384xf32>
    tpu.vector_store %arg4[%c0_50, %c0_51, %c0_52], %61 {strides = array<i32>} : memref<1x8x384xf32, #tpu.memory_space<vmem>>, vector<1x8x384xf32>,
    return
  }
  func.func @transform_0(%arg0: i32) -> (i32, i32, i32) {
    %c0_i32 = arith.constant 0 : i32
    %c0_i32_0 = arith.constant 0 : i32
    %c0_i32_1 = arith.constant 0 : i32
    return %arg0, %c0_i32, %c0_i32_0 : i32, i32, i32
  }
  func.func @transform_1(%arg0: i32) -> (i32, i32, i32) {
    %c0_i32 = arith.constant 0 : i32
    %c0_i32_0 = arith.constant 0 : i32
    %c0_i32_1 = arith.constant 0 : i32
    %c0_i32_2 = arith.constant 0 : i32
    return %c0_i32, %c0_i32_0, %c0_i32_1 : i32, i32, i32
  }
  func.func @transform_2(%arg0: i32) -> (i32, i32) {
    %c0_i32 = arith.constant 0 : i32
    %c0_i32_0 = arith.constant 0 : i32
    %c0_i32_1 = arith.constant 0 : i32
    return %c0_i32, %c0_i32_0 : i32, i32
  }
  func.func @transform_3(%arg0: i32) -> (i32, i32, i32) {
    %c0_i32 = arith.constant 0 : i32
    %c0_i32_0 = arith.constant 0 : i32
    %c0_i32_1 = arith.constant 0 : i32
    return %arg0, %c0_i32, %c0_i32_0 : i32, i32, i32
  }
}

</mosaic_0001>

<llo_original>
// kernel: basic_conv_forward.1
$region0: #{basic_conv_forward.1}
  #allocation0 [shape = 'u32[]', space=smem, size = 0x4, offset = 0x4, fixed_abs, tag = 'smem constant byte address 0x4 - core index']
  #allocation1 [shape = 'u32[144,128]{1,0:T(1,128)}', space=vmem, size = 0x12000, scoped, tag = 'internal scratch']
  %s0 = inlined_call_operand.vmem [shape: f32[2,8,512], index: 0, kind: input, shape index: {}]
  %s1 = inlined_call_operand.vmem [shape: f32[9,8,8], index: 1, kind: input, shape index: {}]
  %s2 = inlined_call_operand.vmem [shape: f32[8,1], index: 2, kind: input, shape index: {}]
  %s3 = inlined_call_operand.vmem [shape: f32[2,8,384], index: 3, kind: output, shape index: {}]
  %s4 = sld [smem:[#allocation0]]
  $region45: #{basic_conv_forward.1} parent=0
    _
  %s6 = ssub.s32 1, %s4
  %s7 = scalar_select 0, %s6, %s4
  loop: start=0, step=1, limit=4
  $region2: #{basic_conv_forward.1} parent=0 // loop_pre_header
    _
  $region3: #{basic_conv_forward.1} parent=0 // loop_header
    %s9 = sphi 0, %s13
    %p10 = scmp.ge.s32.totalorder %s9, 4
    %s19 = sphi 0, %s21
    %s22 = sphi 0, %s19
    %s23 = sphi 0, %s22
    %s39 = sphi 0, %s23
    %s43 = sphi 0, %s43
    %s45 = sphi 0, %s43
    %s46 = sphi 0, %s45
    %s60 = sphi 0, %s46
    %s64 = sphi 0, %s64
    %s66 = sphi 0, %s64
    %s67 = sphi 0, %s66
    %s81 = sphi 0, %s67
    %s87 = sphi 0, %s89
    %s90 = sphi 0, %s87
    %s91 = sphi 0, %s90
    %s107 = sphi 0, %s91
  $region4: #{basic_conv_forward.1} parent=0 // loop_header_branch
    %12 = sbr.rel (%p10) target = $region8
  $region5: #{basic_conv_forward.1} parent=0 // loop_body
    %s14 = ssub.s32 %s9, 1
    %s15 = ssub.s32 %s9, 2
    %s16 = sadd.s32 %s9, 1
    %s17 = ssub.s32 %s9, %s16
    %p18 = scmp.eq.s32.totalorder %s17, 0
    %s20 = sadd.s32 %s19, 1
    %s21 = scalar_select %p18, %s19, %s20
    %p24 = pneg %p18
    %p25 = scmp.eq.s32.totalorder %s9, 1
    %p26 = por %p24, %p25
    %p27 = scmp.ne.s32.totalorder %s19, %s22
    %p28 = scmp.eq.s32.totalorder %s9, 0
    %p29 = por %p27, %p28
    %p30 = scmp.ne.s32.totalorder %s19, %s22
    %p31 = scmp.eq.s32.totalorder %s14, 1
    %p32 = por %p30, %p31
    %p33 = scmp.ne.s32.totalorder %s22, %s23
    %p34 = scmp.eq.s32.totalorder %s14, 0
    %p35 = por %p33, %p34
    %p36 = scmp.ne.s32.totalorder %s22, %s23
    %p37 = scmp.eq.s32.totalorder %s15, 1
    %p38 = por %p36, %p37
    %p40 = scmp.ne.s32.totalorder %s23, %s39
    %p41 = scmp.eq.s32.totalorder %s15, 0
    %p42 = por %p40, %p41
    %s44 = sadd.s32 %s43, 1
    %p47 = scmp.eq.s32.totalorder %s9, 1
    %p48 = scmp.ne.s32.totalorder %s43, %s45
    %p49 = scmp.eq.s32.totalorder %s9, 0
    %p50 = por %p48, %p49
    %p51 = scmp.ne.s32.totalorder %s43, %s45
    %p52 = scmp.eq.s32.totalorder %s14, 1
    %p53 = por %p51, %p52
    %p54 = scmp.ne.s32.totalorder %s45, %s46
    %p55 = scmp.eq.s32.totalorder %s14, 0
    %p56 = por %p54, %p55
    %p57 = scmp.ne.s32.totalorder %s45, %s46
    %p58 = scmp.eq.s32.totalorder %s15, 1
    %p59 = por %p57, %p58
    %p61 = scmp.ne.s32.totalorder %s46, %s60
    %p62 = scmp.eq.s32.totalorder %s15, 0
    %p63 = por %p61, %p62
    %s65 = sadd.s32 %s64, 1
    %p68 = scmp.eq.s32.totalorder %s9, 1
    %p69 = scmp.ne.s32.totalorder %s64, %s66
    %p70 = scmp.eq.s32.totalorder %s9, 0
    %p71 = por %p69, %p70
    %p72 = scmp.ne.s32.totalorder %s64, %s66
    %p73 = scmp.eq.s32.totalorder %s14, 1
    %p74 = por %p72, %p73
    %p75 = scmp.ne.s32.totalorder %s66, %s67
    %p76 = scmp.eq.s32.totalorder %s14, 0
    %p77 = por %p75, %p76
    %p78 = scmp.ne.s32.totalorder %s66, %s67
    %p79 = scmp.eq.s32.totalorder %s15, 1
    %p80 = por %p78, %p79
    %p82 = scmp.ne.s32.totalorder %s67, %s81
    %p83 = scmp.eq.s32.totalorder %s15, 0
    %p84 = por %p82, %p83
    %s85 = ssub.s32 %s9, %s16
    %p86 = scmp.eq.s32.totalorder %s85, 0
    %s88 = sadd.s32 %s87, 1
    %s89 = scalar_select %p86, %s87, %s88
    %p92 = pneg %p86
    %p93 = scmp.eq.s32.totalorder %s9, 1
    %p94 = por %p92, %p93
    %p95 = scmp.ne.s32.totalorder %s87, %s90
    %p96 = scmp.eq.s32.totalorder %s9, 0
    %p97 = por %p95, %p96
    %p98 = scmp.ne.s32.totalorder %s87, %s90
    %p99 = scmp.eq.s32.totalorder %s14, 1
    %p100 = por %p98, %p99
    %p101 = scmp.ne.s32.totalorder %s90, %s91
    %p102 = scmp.eq.s32.totalorder %s14, 0
    %p103 = por %p101, %p102
    %p104 = scmp.ne.s32.totalorder %s90, %s91
    %p105 = scmp.eq.s32.totalorder %s15, 1
    %p106 = por %p104, %p105
    %p108 = scmp.ne.s32.totalorder %s91, %s107
    %p109 = scmp.eq.s32.totalorder %s15, 0
    %p110 = por %p108, %p109
    %p111 = scmp.le.s32.totalorder 1, %s9
    %p112 = scmp.lt.s32.totalorder %s9, 3
    %p113 = pnand %p111, %p112
    %p114 = pneg %p113
    // Predicated region
    $region9: #{basic_conv_forward.1} parent=5 // pred_check
      _
    $region10: #{basic_conv_forward.1} parent=5 // pred_check_branch
      %116 = sbr.rel (%p113) target = $region12
    $region11: #{basic_conv_forward.1} parent=5 // pred_region
      %s117 = ssub.s32 %s9, 1
      // Predicated region
      $region13: #{basic_conv_forward.1} parent=11 // pred_check
        %p118 = pneg %p56
      $region14: #{basic_conv_forward.1} parent=11 // pred_check_branch
        %120 = sbr.rel (%p118) target = $region16
      $region15: #{basic_conv_forward.1} parent=11 // pred_region
        _
      $region16: #{basic_conv_forward.1} parent=11 // pred_fallthru
        _
      // Predicated region
      $region17: #{basic_conv_forward.1} parent=11 // pred_check
        %p121 = pneg %p77
      $region18: #{basic_conv_forward.1} parent=11 // pred_check_branch
        %123 = sbr.rel (%p121) target = $region20
      $region19: #{basic_conv_forward.1} parent=11 // pred_region
        _
      $region20: #{basic_conv_forward.1} parent=11 // pred_fallthru
        _
    $region12: #{basic_conv_forward.1} parent=5 // pred_fallthru
      _
    %p124 = scmp.lt.s32.totalorder %s9, 2
    // Predicated region
    $region21: #{basic_conv_forward.1} parent=5 // pred_check
      %p125 = pneg %p124
    $region22: #{basic_conv_forward.1} parent=5 // pred_check_branch
      %127 = sbr.rel (%p125) target = $region24
    $region23: #{basic_conv_forward.1} parent=5 // pred_region
      // Predicated region
      $region25: #{basic_conv_forward.1} parent=23 // pred_check
        %p128 = pneg %p29
      $region26: #{basic_conv_forward.1} parent=23 // pred_check_branch
        %130 = sbr.rel (%p128) target = $region28
      $region27: #{basic_conv_forward.1} parent=23 // pred_region
        %p131 = scmp.lt.s32.totalorder %s9, 1
        %s132 = scalar_select %p131, %s9, 1
        %s133 = smul.addr %s132, 4
        %s134 = smul.addr %s133, 8
        %s135 = scalar_lea.vmem %s0, %s134
      $region28: #{basic_conv_forward.1} parent=23 // pred_fallthru
        _
    $region24: #{basic_conv_forward.1} parent=5 // pred_fallthru
      _
    %p136 = scmp.le.s32.totalorder 1, %s9
    %p137 = scmp.lt.s32.totalorder %s9, 3
    %p138 = pnand %p136, %p137
    %p139 = pneg %p138
    // Predicated region
    $region29: #{basic_conv_forward.1} parent=5 // pred_check
      _
    $region30: #{basic_conv_forward.1} parent=5 // pred_check_branch
      %141 = sbr.rel (%p138) target = $region32
    $region31: #{basic_conv_forward.1} parent=5 // pred_region
      %s142 = ssub.s32 %s9, 1
      %p143 = scmp.lt.s32.totalorder %s14, 1
      %s144 = scalar_select %p143, %s14, 1
      %s145 = smul.addr %s144, 4
      %s146 = smul.addr %s145, 8
      %s147 = scalar_lea.vmem %s0, %s146
      %p148 = pneg %p35
      %p149 = pneg %p32
      %p150 = pneg %p56
      %p151 = pneg %p53
      %p152 = pneg %p77
      %p153 = pneg %p74
      %p154 = pneg %p103
      %p155 = pneg %p100
      %p156 = scmp.lt.s32.totalorder %s14, 1
      %s157 = scalar_select %p156, %s14, 1
      %s158 = smul.addr %s157, 3
      %s159 = smul.addr %s158, 8
      %s160 = scalar_lea.vmem %s3, %s159
      %p161 = scmp.lt.s32.totalorder %s14, 1
      %s162 = scalar_select %p161, %s14, 1
      %s163 = smul.addr %s162, 4
      %s164 = smul.addr %s163, 8
      %s165 = scalar_lea.vmem %s0, %s164
      %p166 = scmp.lt.s32.totalorder %s14, 1
      %s167 = scalar_select %p166, %s14, 1
      %s168 = smul.addr %s167, 3
      %s169 = smul.addr %s168, 8
      %s170 = scalar_lea.vmem %s3, %s169
      %v171 = vld [vmem:[%s2] sm:$0xff]
      %173 = vset.pattern.permute.xlu0 0
      %174 = vperm.xlu0 %173, %v171
      %v175 = vpop.permute.xlu0 %174
      %v177 = vld [vmem:[%s1] sm:$0xff]
      %v178 = vld [vmem:[%s165] sm:$0xff]
      %v179 = vld [vmem:[%s165 + $0x8] sm:$0xff]
      %v180 = vld [vmem:[%s165 + $0x10] sm:$0xff]
      %vm181 = vcmask 64512
      %v183 = vsel %vm181, %v177, 0
      %185 = vmatprep.subr.mxu0 0.0
      %186 = vmatpush1.msra.mxu0 0.0
      %187 = vmatprep.subr.mxu0 0.0
      %188 = vmatpush1.msra.mxu0 0.0
      %189 = vmatprep.subr.mxu0 0.0
      %190 = vmatpush1.msra.mxu0 0.0
      %191 = vmatprep.subr.mxu0 0.0
      %192 = vmatpush1.msra.mxu0 0.0
      %193 = vmatprep.subr.mxu0 0.0
      %194 = vmatpush1.msra.mxu0 0.0
      %195 = vmatprep.subr.mxu0 0.0
      %196 = vmatpush1.msra.mxu0 0.0
      %197 = vmatprep.subr.mxu0 0.0
      %198 = vmatpush1.msra.mxu0 0.0
      %199 = vmatprep.subr.mxu0 0.0
      %200 = vmatpush1.msra.mxu0 0.0
      %201 = vmatprep.subr.mxu0 0.0
      %202 = vmatpush1.msra.mxu0 0.0
      %203 = vmatprep.subr.mxu0 0.0
      %204 = vmatpush1.msra.mxu0 0.0
      %205 = vmatprep.subr.mxu0 0.0
      %206 = vmatpush1.msra.mxu0 0.0
      %207 = vmatprep.subr.mxu0 0.0
      %208 = vmatpush1.msra.mxu0 0.0
      %209 = vmatprep.subr.mxu0 0.0
      %210 = vmatpush1.msra.mxu0 0.0
      %211 = vmatprep.subr.mxu0 0.0
      %212 = vmatpush1.msra.mxu0 0.0
      %213 = vmatprep.subr.mxu0 0.0
      %214 = vmatpush1.msra.mxu0 0.0
      %215 = vmatprep.subr.mxu0 %v179
      %216 = vmatpush1.msra.mxu0 %v178
      %217 = vmatprep.subr.mxu0 0.0
      %218 = vmatpush2.msra.mxu0 0.0
      %219 = vmatprep.subr.mxu0 0.0
      %220 = vmatpush2.msra.mxu0 0.0
      %221 = vmatprep.subr.mxu0 0.0
      %222 = vmatpush2.msra.mxu0 0.0
      %223 = vmatprep.subr.mxu0 0.0
      %224 = vmatpush2.msra.mxu0 0.0
      %225 = vmatprep.subr.mxu0 0.0
      %226 = vmatpush2.msra.mxu0 0.0
      %227 = vmatprep.subr.mxu0 0.0
      %228 = vmatpush2.msra.mxu0 0.0
      %229 = vmatprep.subr.mxu0 0.0
      %230 = vmatpush2.msra.mxu0 0.0
      %231 = vmatprep.subr.mxu0 0.0
      %232 = vmatpush2.msra.mxu0 0.0
      %233 = vmatprep.subr.mxu0 0.0
      %234 = vmatpush2.msra.mxu0 0.0
      %235 = vmatprep.subr.mxu0 0.0
      %236 = vmatpush2.msra.mxu0 0.0
      %237 = vmatprep.subr.mxu0 0.0
      %238 = vmatpush2.msra.mxu0 0.0
      %239 = vmatprep.subr.mxu0 0.0
      %240 = vmatpush2.msra.mxu0 0.0
      %241 = vmatprep.subr.mxu0 0.0
      %242 = vmatpush2.msra.mxu0 0.0
      %243 = vmatprep.subr.mxu0 0.0
      %244 = vmatpush2.msra.mxu0 0.0
      %245 = vmatprep.subr.mxu0 0.0
      %246 = vmatpush2.msra.mxu0 0.0
      %247 = vmatprep.subr.mxu0 0.0
      %248 = vmatpush2.msra.mxu0 0.0
      %249 = vmatprep.mubr.f32.mxu0 0.0
      %250 = vmatmul.mubr.f32.gmra.mxu0 %v183
      %v251 = vpop.f32.mrf.mxu0
      %v252 = vadd.f32 0.0, %v251
      %v253 = vpop.f32.mrf.mxu0
      %v254 = vadd.f32 0.0, %v253
      %255 = vdwg.mxu0
      %256 = vmatprep.subr.mxu0 0.0
      %257 = vmatpush1.msra.mxu0 0.0
      %258 = vmatprep.subr.mxu0 0.0
      %259 = vmatpush1.msra.mxu0 0.0
      %260 = vmatprep.subr.mxu0 0.0
      %261 = vmatpush1.msra.mxu0 0.0
      %262 = vmatprep.subr.mxu0 0.0
      %263 = vmatpush1.msra.mxu0 0.0
      %264 = vmatprep.subr.mxu0 0.0
      %265 = vmatpush1.msra.mxu0 0.0
      %266 = vmatprep.subr.mxu0 0.0
      %267 = vmatpush1.msra.mxu0 0.0
      %268 = vmatprep.subr.mxu0 0.0
      %269 = vmatpush1.msra.mxu0 0.0
      %270 = vmatprep.subr.mxu0 0.0
      %271 = vmatpush1.msra.mxu0 0.0
      %272 = vmatprep.subr.mxu0 0.0
      %273 = vmatpush1.msra.mxu0 0.0
      %274 = vmatprep.subr.mxu0 0.0
      %275 = vmatpush1.msra.mxu0 0.0
      %276 = vmatprep.subr.mxu0 0.0
      %277 = vmatpush1.msra.mxu0 0.0
      %278 = vmatprep.subr.mxu0 0.0
      %279 = vmatpush1.msra.mxu0 0.0
      %280 = vmatprep.subr.mxu0 0.0
      %281 = vmatpush1.msra.mxu0 0.0
      %282 = vmatprep.subr.mxu0 0.0
      %283 = vmatpush1.msra.mxu0 0.0
      %284 = vmatprep.subr.mxu0 0.0
      %285 = vmatpush1.msra.mxu0 0.0
      %286 = vmatprep.subr.mxu0 0.0
      %287 = vmatpush1.msra.mxu0 %v180
      %288 = vmatprep.subr.mxu0 0.0
      %289 = vmatpush2.msra.mxu0 0.0
      %290 = vmatprep.subr.mxu0 0.0
      %291 = vmatpush2.msra.mxu0 0.0
      %292 = vmatprep.subr.mxu0 0.0
      %293 = vmatpush2.msra.mxu0 0.0
      %294 = vmatprep.subr.mxu0 0.0
      %295 = vmatpush2.msra.mxu0 0.0
      %296 = vmatprep.subr.mxu0 0.0
      %297 = vmatpush2.msra.mxu0 0.0
      %298 = vmatprep.subr.mxu0 0.0
      %299 = vmatpush2.msra.mxu0 0.0
      %300 = vmatprep.subr.mxu0 0.0
      %301 = vmatpush2.msra.mxu0 0.0
      %302 = vmatprep.subr.mxu0 0.0
      %303 = vmatpush2.msra.mxu0 0.0
      %304 = vmatprep.subr.mxu0 0.0
      %305 = vmatpush2.msra.mxu0 0.0
      %306 = vmatprep.subr.mxu0 0.0
      %307 = vmatpush2.msra.mxu0 0.0
      %308 = vmatprep.subr.mxu0 0.0
      %309 = vmatpush2.msra.mxu0 0.0
      %310 = vmatprep.subr.mxu0 0.0
      %311 = vmatpush2.msra.mxu0 0.0
      %312 = vmatprep.subr.mxu0 0.0
      %313 = vmatpush2.msra.mxu0 0.0
      %314 = vmatprep.subr.mxu0 0.0
      %315 = vmatpush2.msra.mxu0 0.0
      %316 = vmatprep.subr.mxu0 0.0
      %317 = vmatpush2.msra.mxu0 0.0
      %318 = vmatprep.subr.mxu0 0.0
      %319 = vmatpush2.msra.mxu0 0.0
      %320 = vmatprep.mubr.f32.mxu0 0.0
      %321 = vmatmul.mubr.f32.gmra.mxu0 %v183
      %v322 = vpop.f32.mrf.mxu0
      %v323 = vadd.f32 0.0, %v322
      %v324 = vpop.f32.mrf.mxu0
      %325 = vdwg.mxu0
      %v326 = vadd.f32 %v175, %v252
      %v327 = vadd.f32 %v175, %v254
      %v328 = vadd.f32 %v175, %v323
      %s329 = scalar_lea.vmem %s1, 8
      %v330 = vld [vmem:[%s329] sm:$0xff]
      %v331 = vld [vmem:[%s165] sm:$0xff]
      %v332 = vld [vmem:[%s165 + $0x8] sm:$0xff]
      %v333 = vld [vmem:[%s165 + $0x10] sm:$0xff]
      %v334 = vld [vmem:[%s165 + $0x18] sm:$0xff]
      %339 = vrot.lane.b32.xlu0 %v331, 127
      %v340 = vpop.permute.xlu0 %339
      %341 = vrot.lane.b32.xlu0 %v332, 127
      %v342 = vpop.permute.xlu0 %341
      %343 = vrot.lane.b32.xlu0 %v333, 127
      %v344 = vpop.permute.xlu0 %343
      %345 = vrot.lane.b32.xlu0 %v334, 127
      %v346 = vpop.permute.xlu0 %345
      %vm347 = vcmask 1039360
      %v348 = vsel %vm347, %v340, %v342
      %v349 = vsel %vm347, %v342, %v344
      %v350 = vsel %vm347, %v344, %v346
      %v355 = vsel %vm181, %v330, 0
      %357 = vmatprep.subr.mxu0 0.0
      %358 = vmatpush1.msra.mxu0 0.0
      %359 = vmatprep.subr.mxu0 0.0
      %360 = vmatpush1.msra.mxu0 0.0
      %361 = vmatprep.subr.mxu0 0.0
      %362 = vmatpush1.msra.mxu0 0.0
      %363 = vmatprep.subr.mxu0 0.0
      %364 = vmatpush1.msra.mxu0 0.0
      %365 = vmatprep.subr.mxu0 0.0
      %366 = vmatpush1.msra.mxu0 0.0
      %367 = vmatprep.subr.mxu0 0.0
      %368 = vmatpush1.msra.mxu0 0.0
      %369 = vmatprep.subr.mxu0 0.0
      %370 = vmatpush1.msra.mxu0 0.0
      %371 = vmatprep.subr.mxu0 0.0
      %372 = vmatpush1.msra.mxu0 0.0
      %373 = vmatprep.subr.mxu0 0.0
      %374 = vmatpush1.msra.mxu0 0.0
      %375 = vmatprep.subr.mxu0 0.0
      %376 = vmatpush1.msra.mxu0 0.0
      %377 = vmatprep.subr.mxu0 0.0
      %378 = vmatpush1.msra.mxu0 0.0
      %379 = vmatprep.subr.mxu0 0.0
      %380 = vmatpush1.msra.mxu0 0.0
      %381 = vmatprep.subr.mxu0 0.0
      %382 = vmatpush1.msra.mxu0 0.0
      %383 = vmatprep.subr.mxu0 0.0
      %384 = vmatpush1.msra.mxu0 0.0
      %385 = vmatprep.subr.mxu0 0.0
      %386 = vmatpush1.msra.mxu0 0.0
      %387 = vmatprep.subr.mxu0 %v349
      %388 = vmatpush1.msra.mxu0 %v348
      %389 = vmatprep.subr.mxu0 0.0
      %390 = vmatpush2.msra.mxu0 0.0
      %391 = vmatprep.subr.mxu0 0.0
      %392 = vmatpush2.msra.mxu0 0.0
      %393 = vmatprep.subr.mxu0 0.0
      %394 = vmatpush2.msra.mxu0 0.0
      %395 = vmatprep.subr.mxu0 0.0
      %396 = vmatpush2.msra.mxu0 0.0
      %397 = vmatprep.subr.mxu0 0.0
      %398 = vmatpush2.msra.mxu0 0.0
      %399 = vmatprep.subr.mxu0 0.0
      %400 = vmatpush2.msra.mxu0 0.0
      %401 = vmatprep.subr.mxu0 0.0
      %402 = vmatpush2.msra.mxu0 0.0
      %403 = vmatprep.subr.mxu0 0.0
      %404 = vmatpush2.msra.mxu0 0.0
      %405 = vmatprep.subr.mxu0 0.0
      %406 = vmatpush2.msra.mxu0 0.0
      %407 = vmatprep.subr.mxu0 0.0
      %408 = vmatpush2.msra.mxu0 0.0
      %409 = vmatprep.subr.mxu0 0.0
      %410 = vmatpush2.msra.mxu0 0.0
      %411 = vmatprep.subr.mxu0 0.0
      %412 = vmatpush2.msra.mxu0 0.0
      %413 = vmatprep.subr.mxu0 0.0
      %414 = vmatpush2.msra.mxu0 0.0
      %415 = vmatprep.subr.mxu0 0.0
      %416 = vmatpush2.msra.mxu0 0.0
      %417 = vmatprep.subr.mxu0 0.0
      %418 = vmatpush2.msra.mxu0 0.0
      %419 = vmatprep.subr.mxu0 0.0
      %420 = vmatpush2.msra.mxu0 0.0
      %421 = vmatprep.mubr.f32.mxu0 0.0
      %422 = vmatmul.mubr.f32.gmra.mxu0 %v355
      %v423 = vpop.f32.mrf.mxu0
      %v424 = vadd.f32 0.0, %v423
      %v425 = vpop.f32.mrf.mxu0
      %v426 = vadd.f32 0.0, %v425
      %427 = vdwg.mxu0
      %428 = vmatprep.subr.mxu0 0.0
      %429 = vmatpush1.msra.mxu0 0.0
      %430 = vmatprep.subr.mxu0 0.0
      %431 = vmatpush1.msra.mxu0 0.0
      %432 = vmatprep.subr.mxu0 0.0
      %433 = vmatpush1.msra.mxu0 0.0
      %434 = vmatprep.subr.mxu0 0.0
      %435 = vmatpush1.msra.mxu0 0.0
      %436 = vmatprep.subr.mxu0 0.0
      %437 = vmatpush1.msra.mxu0 0.0
      %438 = vmatprep.subr.mxu0 0.0
      %439 = vmatpush1.msra.mxu0 0.0
      %440 = vmatprep.subr.mxu0 0.0
      %441 = vmatpush1.msra.mxu0 0.0
      %442 = vmatprep.subr.mxu0 0.0
      %443 = vmatpush1.msra.mxu0 0.0
      %444 = vmatprep.subr.mxu0 0.0
      %445 = vmatpush1.msra.mxu0 0.0
      %446 = vmatprep.subr.mxu0 0.0
      %447 = vmatpush1.msra.mxu0 0.0
      %448 = vmatprep.subr.mxu0 0.0
      %449 = vmatpush1.msra.mxu0 0.0
      %450 = vmatprep.subr.mxu0 0.0
      %451 = vmatpush1.msra.mxu0 0.0
      %452 = vmatprep.subr.mxu0 0.0
      %453 = vmatpush1.msra.mxu0 0.0
      %454 = vmatprep.subr.mxu0 0.0
      %455 = vmatpush1.msra.mxu0 0.0
      %456 = vmatprep.subr.mxu0 0.0
      %457 = vmatpush1.msra.mxu0 0.0
      %458 = vmatprep.subr.mxu0 0.0
      %459 = vmatpush1.msra.mxu0 %v350
      %460 = vmatprep.subr.mxu0 0.0
      %461 = vmatpush2.msra.mxu0 0.0
      %462 = vmatprep.subr.mxu0 0.0
      %463 = vmatpush2.msra.mxu0 0.0
      %464 = vmatprep.subr.mxu0 0.0
      %465 = vmatpush2.msra.mxu0 0.0
      %466 = vmatprep.subr.mxu0 0.0
      %467 = vmatpush2.msra.mxu0 0.0
      %468 = vmatprep.subr.mxu0 0.0
      %469 = vmatpush2.msra.mxu0 0.0
      %470 = vmatprep.subr.mxu0 0.0
      %471 = vmatpush2.msra.mxu0 0.0
      %472 = vmatprep.subr.mxu0 0.0
      %473 = vmatpush2.msra.mxu0 0.0
      %474 = vmatprep.subr.mxu0 0.0
      %475 = vmatpush2.msra.mxu0 0.0
      %476 = vmatprep.subr.mxu0 0.0
      %477 = vmatpush2.msra.mxu0 0.0
      %478 = vmatprep.subr.mxu0 0.0
      %479 = vmatpush2.msra.mxu0 0.0
      %480 = vmatprep.subr.mxu0 0.0
      %481 = vmatpush2.msra.mxu0 0.0
      %482 = vmatprep.subr.mxu0 0.0
      %483 = vmatpush2.msra.mxu0 0.0
      %484 = vmatprep.subr.mxu0 0.0
      %485 = vmatpush2.msra.mxu0 0.0
      %486 = vmatprep.subr.mxu0 0.0
      %487 = vmatpush2.msra.mxu0 0.0
      %488 = vmatprep.subr.mxu0 0.0
      %489 = vmatpush2.msra.mxu0 0.0
      %490 = vmatprep.subr.mxu0 0.0
      %491 = vmatpush2.msra.mxu0 0.0
      %492 = vmatprep.mubr.f32.mxu0 0.0
      %493 = vmatmul.mubr.f32.gmra.mxu0 %v355
      %v494 = vpop.f32.mrf.mxu0
      %v495 = vadd.f32 0.0, %v494
      %v496 = vpop.f32.mrf.mxu0
      %497 = vdwg.mxu0
      %v498 = vadd.f32 %v326, %v424
      %v499 = vadd.f32 %v327, %v426
      %v500 = vadd.f32 %v328, %v495
      %s501 = scalar_lea.vmem %s1, 16
      %v502 = vld [vmem:[%s501] sm:$0xff]
      %503 = vrot.lane.b32.xlu0 %v331, 126
      %v504 = vpop.permute.xlu0 %503
      %505 = vrot.lane.b32.xlu0 %v332, 126
      %v506 = vpop.permute.xlu0 %505
      %507 = vrot.lane.b32.xlu0 %v333, 126
      %v508 = vpop.permute.xlu0 %507
      %509 = vrot.lane.b32.xlu0 %v334, 126
      %v510 = vpop.permute.xlu0 %509
      %vm511 = vcmask 1031168
      %v512 = vsel %vm511, %v504, %v506
      %v513 = vsel %vm511, %v506, %v508
      %v514 = vsel %vm511, %v508, %v510
      %v519 = vsel %vm181, %v502, 0
      %521 = vmatprep.subr.mxu0 0.0
      %522 = vmatpush1.msra.mxu0 0.0
      %523 = vmatprep.subr.mxu0 0.0
      %524 = vmatpush1.msra.mxu0 0.0
      %525 = vmatprep.subr.mxu0 0.0
      %526 = vmatpush1.msra.mxu0 0.0
      %527 = vmatprep.subr.mxu0 0.0
      %528 = vmatpush1.msra.mxu0 0.0
      %529 = vmatprep.subr.mxu0 0.0
      %530 = vmatpush1.msra.mxu0 0.0
      %531 = vmatprep.subr.mxu0 0.0
      %532 = vmatpush1.msra.mxu0 0.0
      %533 = vmatprep.subr.mxu0 0.0
      %534 = vmatpush1.msra.mxu0 0.0
      %535 = vmatprep.subr.mxu0 0.0
      %536 = vmatpush1.msra.mxu0 0.0
      %537 = vmatprep.subr.mxu0 0.0
      %538 = vmatpush1.msra.mxu0 0.0
      %539 = vmatprep.subr.mxu0 0.0
      %540 = vmatpush1.msra.mxu0 0.0
      %541 = vmatprep.subr.mxu0 0.0
      %542 = vmatpush1.msra.mxu0 0.0
      %543 = vmatprep.subr.mxu0 0.0
      %544 = vmatpush1.msra.mxu0 0.0
      %545 = vmatprep.subr.mxu0 0.0
      %546 = vmatpush1.msra.mxu0 0.0
      %547 = vmatprep.subr.mxu0 0.0
      %548 = vmatpush1.msra.mxu0 0.0
      %549 = vmatprep.subr.mxu0 0.0
      %550 = vmatpush1.msra.mxu0 0.0
      %551 = vmatprep.subr.mxu0 %v513
      %552 = vmatpush1.msra.mxu0 %v512
      %553 = vmatprep.subr.mxu0 0.0
      %554 = vmatpush2.msra.mxu0 0.0
      %555 = vmatprep.subr.mxu0 0.0
      %556 = vmatpush2.msra.mxu0 0.0
      %557 = vmatprep.subr.mxu0 0.0
      %558 = vmatpush2.msra.mxu0 0.0
      %559 = vmatprep.subr.mxu0 0.0
      %560 = vmatpush2.msra.mxu0 0.0
      %561 = vmatprep.subr.mxu0 0.0
      %562 = vmatpush2.msra.mxu0 0.0
      %563 = vmatprep.subr.mxu0 0.0
      %564 = vmatpush2.msra.mxu0 0.0
      %565 = vmatprep.subr.mxu0 0.0
      %566 = vmatpush2.msra.mxu0 0.0
      %567 = vmatprep.subr.mxu0 0.0
      %568 = vmatpush2.msra.mxu0 0.0
      %569 = vmatprep.subr.mxu0 0.0
      %570 = vmatpush2.msra.mxu0 0.0
      %571 = vmatprep.subr.mxu0 0.0
      %572 = vmatpush2.msra.mxu0 0.0
      %573 = vmatprep.subr.mxu0 0.0
      %574 = vmatpush2.msra.mxu0 0.0
      %575 = vmatprep.subr.mxu0 0.0
      %576 = vmatpush2.msra.mxu0 0.0
      %577 = vmatprep.subr.mxu0 0.0
      %578 = vmatpush2.msra.mxu0 0.0
      %579 = vmatprep.subr.mxu0 0.0
      %580 = vmatpush2.msra.mxu0 0.0
      %581 = vmatprep.subr.mxu0 0.0
      %582 = vmatpush2.msra.mxu0 0.0
      %583 = vmatprep.subr.mxu0 0.0
      %584 = vmatpush2.msra.mxu0 0.0
      %585 = vmatprep.mubr.f32.mxu0 0.0
      %586 = vmatmul.mubr.f32.gmra.mxu0 %v519
      %v587 = vpop.f32.mrf.mxu0
      %v588 = vadd.f32 0.0, %v587
      %v589 = vpop.f32.mrf.mxu0
      %v590 = vadd.f32 0.0, %v589
      %591 = vdwg.mxu0
      %592 = vmatprep.subr.mxu0 0.0
      %593 = vmatpush1.msra.mxu0 0.0
      %594 = vmatprep.subr.mxu0 0.0
      %595 = vmatpush1.msra.mxu0 0.0
      %596 = vmatprep.subr.mxu0 0.0
      %597 = vmatpush1.msra.mxu0 0.0
      %598 = vmatprep.subr.mxu0 0.0
      %599 = vmatpush1.msra.mxu0 0.0
      %600 = vmatprep.subr.mxu0 0.0
      %601 = vmatpush1.msra.mxu0 0.0
      %602 = vmatprep.subr.mxu0 0.0
      %603 = vmatpush1.msra.mxu0 0.0
      %604 = vmatprep.subr.mxu0 0.0
      %605 = vmatpush1.msra.mxu0 0.0
      %606 = vmatprep.subr.mxu0 0.0
      %607 = vmatpush1.msra.mxu0 0.0
      %608 = vmatprep.subr.mxu0 0.0
      %609 = vmatpush1.msra.mxu0 0.0
      %610 = vmatprep.subr.mxu0 0.0
      %611 = vmatpush1.msra.mxu0 0.0
      %612 = vmatprep.subr.mxu0 0.0
      %613 = vmatpush1.msra.mxu0 0.0
      %614 = vmatprep.subr.mxu0 0.0
      %615 = vmatpush1.msra.mxu0 0.0
      %616 = vmatprep.subr.mxu0 0.0
      %617 = vmatpush1.msra.mxu0 0.0
      %618 = vmatprep.subr.mxu0 0.0
      %619 = vmatpush1.msra.mxu0 0.0
      %620 = vmatprep.subr.mxu0 0.0
      %621 = vmatpush1.msra.mxu0 0.0
      %622 = vmatprep.subr.mxu0 0.0
      %623 = vmatpush1.msra.mxu0 %v514
      %624 = vmatprep.subr.mxu0 0.0
      %625 = vmatpush2.msra.mxu0 0.0
      %626 = vmatprep.subr.mxu0 0.0
      %627 = vmatpush2.msra.mxu0 0.0
      %628 = vmatprep.subr.mxu0 0.0
      %629 = vmatpush2.msra.mxu0 0.0
      %630 = vmatprep.subr.mxu0 0.0
      %631 = vmatpush2.msra.mxu0 0.0
      %632 = vmatprep.subr.mxu0 0.0
      %633 = vmatpush2.msra.mxu0 0.0
      %634 = vmatprep.subr.mxu0 0.0
      %635 = vmatpush2.msra.mxu0 0.0
      %636 = vmatprep.subr.mxu0 0.0
      %637 = vmatpush2.msra.mxu0 0.0
      %638 = vmatprep.subr.mxu0 0.0
      %639 = vmatpush2.msra.mxu0 0.0
      %640 = vmatprep.subr.mxu0 0.0
      %641 = vmatpush2.msra.mxu0 0.0
      %642 = vmatprep.subr.mxu0 0.0
      %643 = vmatpush2.msra.mxu0 0.0
      %644 = vmatprep.subr.mxu0 0.0
      %645 = vmatpush2.msra.mxu0 0.0
      %646 = vmatprep.subr.mxu0 0.0
      %647 = vmatpush2.msra.mxu0 0.0
      %648 = vmatprep.subr.mxu0 0.0
      %649 = vmatpush2.msra.mxu0 0.0
      %650 = vmatprep.subr.mxu0 0.0
      %651 = vmatpush2.msra.mxu0 0.0
      %652 = vmatprep.subr.mxu0 0.0
      %653 = vmatpush2.msra.mxu0 0.0
      %654 = vmatprep.subr.mxu0 0.0
      %655 = vmatpush2.msra.mxu0 0.0
      %656 = vmatprep.mubr.f32.mxu0 0.0
      %657 = vmatmul.mubr.f32.gmra.mxu0 %v519
      %v658 = vpop.f32.mrf.mxu0
      %v659 = vadd.f32 0.0, %v658
      %v660 = vpop.f32.mrf.mxu0
      %661 = vdwg.mxu0
      %v662 = vadd.f32 %v498, %v588
      %v663 = vadd.f32 %v499, %v590
      %v664 = vadd.f32 %v500, %v659
      %s665 = scalar_lea.vmem %s1, 24
      %v666 = vld [vmem:[%s665] sm:$0xff]
      %667 = vrot.lane.b32.xlu0 %v331, 110
      %v668 = vpop.permute.xlu0 %667
      %669 = vrot.lane.b32.xlu0 %v332, 110
      %v670 = vpop.permute.xlu0 %669
      %671 = vrot.lane.b32.xlu0 %v333, 110
      %v672 = vpop.permute.xlu0 %671
      %673 = vrot.lane.b32.xlu0 %v334, 110
      %v674 = vpop.permute.xlu0 %673
      %vm675 = vcmask 900096
      %v676 = vsel %vm675, %v668, %v670
      %v677 = vsel %vm675, %v670, %v672
      %v678 = vsel %vm675, %v672, %v674
      %v683 = vsel %vm181, %v666, 0
      %685 = vmatprep.subr.mxu0 0.0
      %686 = vmatpush1.msra.mxu0 0.0
      %687 = vmatprep.subr.mxu0 0.0
      %688 = vmatpush1.msra.mxu0 0.0
      %689 = vmatprep.subr.mxu0 0.0
      %690 = vmatpush1.msra.mxu0 0.0
      %691 = vmatprep.subr.mxu0 0.0
      %692 = vmatpush1.msra.mxu0 0.0
      %693 = vmatprep.subr.mxu0 0.0
      %694 = vmatpush1.msra.mxu0 0.0
      %695 = vmatprep.subr.mxu0 0.0
      %696 = vmatpush1.msra.mxu0 0.0
      %697 = vmatprep.subr.mxu0 0.0
      %698 = vmatpush1.msra.mxu0 0.0
      %699 = vmatprep.subr.mxu0 0.0
      %700 = vmatpush1.msra.mxu0 0.0
      %701 = vmatprep.subr.mxu0 0.0
      %702 = vmatpush1.msra.mxu0 0.0
      %703 = vmatprep.subr.mxu0 0.0
      %704 = vmatpush1.msra.mxu0 0.0
      %705 = vmatprep.subr.mxu0 0.0
      %706 = vmatpush1.msra.mxu0 0.0
      %707 = vmatprep.subr.mxu0 0.0
      %708 = vmatpush1.msra.mxu0 0.0
      %709 = vmatprep.subr.mxu0 0.0
      %710 = vmatpush1.msra.mxu0 0.0
      %711 = vmatprep.subr.mxu0 0.0
      %712 = vmatpush1.msra.mxu0 0.0
      %713 = vmatprep.subr.mxu0 0.0
      %714 = vmatpush1.msra.mxu0 0.0
      %715 = vmatprep.subr.mxu0 %v677
      %716 = vmatpush1.msra.mxu0 %v676
      %717 = vmatprep.subr.mxu0 0.0
      %718 = vmatpush2.msra.mxu0 0.0
      %719 = vmatprep.subr.mxu0 0.0
      %720 = vmatpush2.msra.mxu0 0.0
      %721 = vmatprep.subr.mxu0 0.0
      %722 = vmatpush2.msra.mxu0 0.0
      %723 = vmatprep.subr.mxu0 0.0
      %724 = vmatpush2.msra.mxu0 0.0
      %725 = vmatprep.subr.mxu0 0.0
      %726 = vmatpush2.msra.mxu0 0.0
      %727 = vmatprep.subr.mxu0 0.0
      %728 = vmatpush2.msra.mxu0 0.0
      %729 = vmatprep.subr.mxu0 0.0
      %730 = vmatpush2.msra.mxu0 0.0
      %731 = vmatprep.subr.mxu0 0.0
      %732 = vmatpush2.msra.mxu0 0.0
      %733 = vmatprep.subr.mxu0 0.0
      %734 = vmatpush2.msra.mxu0 0.0
      %735 = vmatprep.subr.mxu0 0.0
      %736 = vmatpush2.msra.mxu0 0.0
      %737 = vmatprep.subr.mxu0 0.0
      %738 = vmatpush2.msra.mxu0 0.0
      %739 = vmatprep.subr.mxu0 0.0
      %740 = vmatpush2.msra.mxu0 0.0
      %741 = vmatprep.subr.mxu0 0.0
      %742 = vmatpush2.msra.mxu0 0.0
      %743 = vmatprep.subr.mxu0 0.0
      %744 = vmatpush2.msra.mxu0 0.0
      %745 = vmatprep.subr.mxu0 0.0
      %746 = vmatpush2.msra.mxu0 0.0
      %747 = vmatprep.subr.mxu0 0.0
      %748 = vmatpush2.msra.mxu0 0.0
      %749 = vmatprep.mubr.f32.mxu0 0.0
      %750 = vmatmul.mubr.f32.gmra.mxu0 %v683
      %v751 = vpop.f32.mrf.mxu0
      %v752 = vadd.f32 0.0, %v751
      %v753 = vpop.f32.mrf.mxu0
      %v754 = vadd.f32 0.0, %v753
      %755 = vdwg.mxu0
      %756 = vmatprep.subr.mxu0 0.0
      %757 = vmatpush1.msra.mxu0 0.0
      %758 = vmatprep.subr.mxu0 0.0
      %759 = vmatpush1.msra.mxu0 0.0
      %760 = vmatprep.subr.mxu0 0.0
      %761 = vmatpush1.msra.mxu0 0.0
      %762 = vmatprep.subr.mxu0 0.0
      %763 = vmatpush1.msra.mxu0 0.0
      %764 = vmatprep.subr.mxu0 0.0
      %765 = vmatpush1.msra.mxu0 0.0
      %766 = vmatprep.subr.mxu0 0.0
      %767 = vmatpush1.msra.mxu0 0.0
      %768 = vmatprep.subr.mxu0 0.0
      %769 = vmatpush1.msra.mxu0 0.0
      %770 = vmatprep.subr.mxu0 0.0
      %771 = vmatpush1.msra.mxu0 0.0
      %772 = vmatprep.subr.mxu0 0.0
      %773 = vmatpush1.msra.mxu0 0.0
      %774 = vmatprep.subr.mxu0 0.0
      %775 = vmatpush1.msra.mxu0 0.0
      %776 = vmatprep.subr.mxu0 0.0
      %777 = vmatpush1.msra.mxu0 0.0
      %778 = vmatprep.subr.mxu0 0.0
      %779 = vmatpush1.msra.mxu0 0.0
      %780 = vmatprep.subr.mxu0 0.0
      %781 = vmatpush1.msra.mxu0 0.0
      %782 = vmatprep.subr.mxu0 0.0
      %783 = vmatpush1.msra.mxu0 0.0
      %784 = vmatprep.subr.mxu0 0.0
      %785 = vmatpush1.msra.mxu0 0.0
      %786 = vmatprep.subr.mxu0 0.0
      %787 = vmatpush1.msra.mxu0 %v678
      %788 = vmatprep.subr.mxu0 0.0
      %789 = vmatpush2.msra.mxu0 0.0
      %790 = vmatprep.subr.mxu0 0.0
      %791 = vmatpush2.msra.mxu0 0.0
      %792 = vmatprep.subr.mxu0 0.0
      %793 = vmatpush2.msra.mxu0 0.0
      %794 = vmatprep.subr.mxu0 0.0
      %795 = vmatpush2.msra.mxu0 0.0
      %796 = vmatprep.subr.mxu0 0.0
      %797 = vmatpush2.msra.mxu0 0.0
      %798 = vmatprep.subr.mxu0 0.0
      %799 = vmatpush2.msra.mxu0 0.0
      %800 = vmatprep.subr.mxu0 0.0
      %801 = vmatpush2.msra.mxu0 0.0
      %802 = vmatprep.subr.mxu0 0.0
      %803 = vmatpush2.msra.mxu0 0.0
      %804 = vmatprep.subr.mxu0 0.0
      %805 = vmatpush2.msra.mxu0 0.0
      %806 = vmatprep.subr.mxu0 0.0
      %807 = vmatpush2.msra.mxu0 0.0
      %808 = vmatprep.subr.mxu0 0.0
      %809 = vmatpush2.msra.mxu0 0.0
      %810 = vmatprep.subr.mxu0 0.0
      %811 = vmatpush2.msra.mxu0 0.0
      %812 = vmatprep.subr.mxu0 0.0
      %813 = vmatpush2.msra.mxu0 0.0
      %814 = vmatprep.subr.mxu0 0.0
      %815 = vmatpush2.msra.mxu0 0.0
      %816 = vmatprep.subr.mxu0 0.0
      %817 = vmatpush2.msra.mxu0 0.0
      %818 = vmatprep.subr.mxu0 0.0
      %819 = vmatpush2.msra.mxu0 0.0
      %820 = vmatprep.mubr.f32.mxu0 0.0
      %821 = vmatmul.mubr.f32.gmra.mxu0 %v683
      %v822 = vpop.f32.mrf.mxu0
      %v823 = vadd.f32 0.0, %v822
      %v824 = vpop.f32.mrf.mxu0
      %825 = vdwg.mxu0
      %v826 = vadd.f32 %v662, %v752
      %v827 = vadd.f32 %v663, %v754
      %v828 = vadd.f32 %v664, %v823
      %s829 = scalar_lea.vmem %s1, 32
      %v830 = vld [vmem:[%s829] sm:$0xff]
      %831 = vrot.lane.b32.xlu0 %v331, 109
      %v832 = vpop.permute.xlu0 %831
      %833 = vrot.lane.b32.xlu0 %v332, 109
      %v834 = vpop.permute.xlu0 %833
      %835 = vrot.lane.b32.xlu0 %v333, 109
      %v836 = vpop.permute.xlu0 %835
      %837 = vrot.lane.b32.xlu0 %v334, 109
      %v838 = vpop.permute.xlu0 %837
      %vm839 = vcmask 891904
      %v840 = vsel %vm839, %v832, %v834
      %v841 = vsel %vm839, %v834, %v836
      %v842 = vsel %vm839, %v836, %v838
      %v847 = vsel %vm181, %v830, 0
      %849 = vmatprep.subr.mxu0 0.0
      %850 = vmatpush1.msra.mxu0 0.0
      %851 = vmatprep.subr.mxu0 0.0
      %852 = vmatpush1.msra.mxu0 0.0
      %853 = vmatprep.subr.mxu0 0.0
      %854 = vmatpush1.msra.mxu0 0.0
      %855 = vmatprep.subr.mxu0 0.0
      %856 = vmatpush1.msra.mxu0 0.0
      %857 = vmatprep.subr.mxu0 0.0
      %858 = vmatpush1.msra.mxu0 0.0
      %859 = vmatprep.subr.mxu0 0.0
      %860 = vmatpush1.msra.mxu0 0.0
      %861 = vmatprep.subr.mxu0 0.0
      %862 = vmatpush1.msra.mxu0 0.0
      %863 = vmatprep.subr.mxu0 0.0
      %864 = vmatpush1.msra.mxu0 0.0
      %865 = vmatprep.subr.mxu0 0.0
      %866 = vmatpush1.msra.mxu0 0.0
      %867 = vmatprep.subr.mxu0 0.0
      %868 = vmatpush1.msra.mxu0 0.0
      %869 = vmatprep.subr.mxu0 0.0
      %870 = vmatpush1.msra.mxu0 0.0
      %871 = vmatprep.subr.mxu0 0.0
      %872 = vmatpush1.msra.mxu0 0.0
      %873 = vmatprep.subr.mxu0 0.0
      %874 = vmatpush1.msra.mxu0 0.0
      %875 = vmatprep.subr.mxu0 0.0
      %876 = vmatpush1.msra.mxu0 0.0
      %877 = vmatprep.subr.mxu0 0.0
      %878 = vmatpush1.msra.mxu0 0.0
      %879 = vmatprep.subr.mxu0 %v841
      %880 = vmatpush1.msra.mxu0 %v840
      %881 = vmatprep.subr.mxu0 0.0
      %882 = vmatpush2.msra.mxu0 0.0
      %883 = vmatprep.subr.mxu0 0.0
      %884 = vmatpush2.msra.mxu0 0.0
      %885 = vmatprep.subr.mxu0 0.0
      %886 = vmatpush2.msra.mxu0 0.0
      %887 = vmatprep.subr.mxu0 0.0
      %888 = vmatpush2.msra.mxu0 0.0
      %889 = vmatprep.subr.mxu0 0.0
      %890 = vmatpush2.msra.mxu0 0.0
      %891 = vmatprep.subr.mxu0 0.0
      %892 = vmatpush2.msra.mxu0 0.0
      %893 = vmatprep.subr.mxu0 0.0
      %894 = vmatpush2.msra.mxu0 0.0
      %895 = vmatprep.subr.mxu0 0.0
      %896 = vmatpush2.msra.mxu0 0.0
      %897 = vmatprep.subr.mxu0 0.0
      %898 = vmatpush2.msra.mxu0 0.0
      %899 = vmatprep.subr.mxu0 0.0
      %900 = vmatpush2.msra.mxu0 0.0
      %901 = vmatprep.subr.mxu0 0.0
      %902 = vmatpush2.msra.mxu0 0.0
      %903 = vmatprep.subr.mxu0 0.0
      %904 = vmatpush2.msra.mxu0 0.0
      %905 = vmatprep.subr.mxu0 0.0
      %906 = vmatpush2.msra.mxu0 0.0
      %907 = vmatprep.subr.mxu0 0.0
      %908 = vmatpush2.msra.mxu0 0.0
      %909 = vmatprep.subr.mxu0 0.0
      %910 = vmatpush2.msra.mxu0 0.0
      %911 = vmatprep.subr.mxu0 0.0
      %912 = vmatpush2.msra.mxu0 0.0
      %913 = vmatprep.mubr.f32.mxu0 0.0
      %914 = vmatmul.mubr.f32.gmra.mxu0 %v847
      %v915 = vpop.f32.mrf.mxu0
      %v916 = vadd.f32 0.0, %v915
      %v917 = vpop.f32.mrf.mxu0
      %v918 = vadd.f32 0.0, %v917
      %919 = vdwg.mxu0
      %920 = vmatprep.subr.mxu0 0.0
      %921 = vmatpush1.msra.mxu0 0.0
      %922 = vmatprep.subr.mxu0 0.0
      %923 = vmatpush1.msra.mxu0 0.0
      %924 = vmatprep.subr.mxu0 0.0
      %925 = vmatpush1.msra.mxu0 0.0
      %926 = vmatprep.subr.mxu0 0.0
      %927 = vmatpush1.msra.mxu0 0.0
      %928 = vmatprep.subr.mxu0 0.0
      %929 = vmatpush1.msra.mxu0 0.0
      %930 = vmatprep.subr.mxu0 0.0
      %931 = vmatpush1.msra.mxu0 0.0
      %932 = vmatprep.subr.mxu0 0.0
      %933 = vmatpush1.msra.mxu0 0.0
      %934 = vmatprep.subr.mxu0 0.0
      %935 = vmatpush1.msra.mxu0 0.0
      %936 = vmatprep.subr.mxu0 0.0
      %937 = vmatpush1.msra.mxu0 0.0
      %938 = vmatprep.subr.mxu0 0.0
      %939 = vmatpush1.msra.mxu0 0.0
      %940 = vmatprep.subr.mxu0 0.0
      %941 = vmatpush1.msra.mxu0 0.0
      %942 = vmatprep.subr.mxu0 0.0
      %943 = vmatpush1.msra.mxu0 0.0
      %944 = vmatprep.subr.mxu0 0.0
      %945 = vmatpush1.msra.mxu0 0.0
      %946 = vmatprep.subr.mxu0 0.0
      %947 = vmatpush1.msra.mxu0 0.0
      %948 = vmatprep.subr.mxu0 0.0
      %949 = vmatpush1.msra.mxu0 0.0
      %950 = vmatprep.subr.mxu0 0.0
      %951 = vmatpush1.msra.mxu0 %v842
      %952 = vmatprep.subr.mxu0 0.0
      %953 = vmatpush2.msra.mxu0 0.0
      %954 = vmatprep.subr.mxu0 0.0
      %955 = vmatpush2.msra.mxu0 0.0
      %956 = vmatprep.subr.mxu0 0.0
      %957 = vmatpush2.msra.mxu0 0.0
      %958 = vmatprep.subr.mxu0 0.0
      %959 = vmatpush2.msra.mxu0 0.0
      %960 = vmatprep.subr.mxu0 0.0
      %961 = vmatpush2.msra.mxu0 0.0
      %962 = vmatprep.subr.mxu0 0.0
      %963 = vmatpush2.msra.mxu0 0.0
      %964 = vmatprep.subr.mxu0 0.0
      %965 = vmatpush2.msra.mxu0 0.0
      %966 = vmatprep.subr.mxu0 0.0
      %967 = vmatpush2.msra.mxu0 0.0
      %968 = vmatprep.subr.mxu0 0.0
      %969 = vmatpush2.msra.mxu0 0.0
      %970 = vmatprep.subr.mxu0 0.0
      %971 = vmatpush2.msra.mxu0 0.0
      %972 = vmatprep.subr.mxu0 0.0
      %973 = vmatpush2.msra.mxu0 0.0
      %974 = vmatprep.subr.mxu0 0.0
      %975 = vmatpush2.msra.mxu0 0.0
      %976 = vmatprep.subr.mxu0 0.0
      %977 = vmatpush2.msra.mxu0 0.0
      %978 = vmatprep.subr.mxu0 0.0
      %979 = vmatpush2.msra.mxu0 0.0
      %980 = vmatprep.subr.mxu0 0.0
      %981 = vmatpush2.msra.mxu0 0.0
      %982 = vmatprep.subr.mxu0 0.0
      %983 = vmatpush2.msra.mxu0 0.0
      %984 = vmatprep.mubr.f32.mxu0 0.0
      %985 = vmatmul.mubr.f32.gmra.mxu0 %v847
      %v986 = vpop.f32.mrf.mxu0
      %v987 = vadd.f32 0.0, %v986
      %v988 = vpop.f32.mrf.mxu0
      %989 = vdwg.mxu0
      %v990 = vadd.f32 %v826, %v916
      %v991 = vadd.f32 %v827, %v918
      %v992 = vadd.f32 %v828, %v987
      %s993 = scalar_lea.vmem %s1, 40
      %v994 = vld [vmem:[%s993] sm:$0xff]
      %995 = vrot.lane.b32.xlu0 %v331, 108
      %v996 = vpop.permute.xlu0 %995
      %997 = vrot.lane.b32.xlu0 %v332, 108
      %v998 = vpop.permute.xlu0 %997
      %999 = vrot.lane.b32.xlu0 %v333, 108
      %v1000 = vpop.permute.xlu0 %999
      %1001 = vrot.lane.b32.xlu0 %v334, 108
      %v1002 = vpop.permute.xlu0 %1001
      %vm1003 = vcmask 883712
      %v1004 = vsel %vm1003, %v996, %v998
      %v1005 = vsel %vm1003, %v998, %v1000
      %v1006 = vsel %vm1003, %v1000, %v1002
      %v1011 = vsel %vm181, %v994, 0
      %1013 = vmatprep.subr.mxu0 0.0
      %1014 = vmatpush1.msra.mxu0 0.0
      %1015 = vmatprep.subr.mxu0 0.0
      %1016 = vmatpush1.msra.mxu0 0.0
      %1017 = vmatprep.subr.mxu0 0.0
      %1018 = vmatpush1.msra.mxu0 0.0
      %1019 = vmatprep.subr.mxu0 0.0
      %1020 = vmatpush1.msra.mxu0 0.0
      %1021 = vmatprep.subr.mxu0 0.0
      %1022 = vmatpush1.msra.mxu0 0.0
      %1023 = vmatprep.subr.mxu0 0.0
      %1024 = vmatpush1.msra.mxu0 0.0
      %1025 = vmatprep.subr.mxu0 0.0
      %1026 = vmatpush1.msra.mxu0 0.0
      %1027 = vmatprep.subr.mxu0 0.0
      %1028 = vmatpush1.msra.mxu0 0.0
      %1029 = vmatprep.subr.mxu0 0.0
      %1030 = vmatpush1.msra.mxu0 0.0
      %1031 = vmatprep.subr.mxu0 0.0
      %1032 = vmatpush1.msra.mxu0 0.0
      %1033 = vmatprep.subr.mxu0 0.0
      %1034 = vmatpush1.msra.mxu0 0.0
      %1035 = vmatprep.subr.mxu0 0.0
      %1036 = vmatpush1.msra.mxu0 0.0
      %1037 = vmatprep.subr.mxu0 0.0
      %1038 = vmatpush1.msra.mxu0 0.0
      %1039 = vmatprep.subr.mxu0 0.0
      %1040 = vmatpush1.msra.mxu0 0.0
      %1041 = vmatprep.subr.mxu0 0.0
      %1042 = vmatpush1.msra.mxu0 0.0
      %1043 = vmatprep.subr.mxu0 %v1005
      %1044 = vmatpush1.msra.mxu0 %v1004
      %1045 = vmatprep.subr.mxu0 0.0
      %1046 = vmatpush2.msra.mxu0 0.0
      %1047 = vmatprep.subr.mxu0 0.0
      %1048 = vmatpush2.msra.mxu0 0.0
      %1049 = vmatprep.subr.mxu0 0.0
      %1050 = vmatpush2.msra.mxu0 0.0
      %1051 = vmatprep.subr.mxu0 0.0
      %1052 = vmatpush2.msra.mxu0 0.0
      %1053 = vmatprep.subr.mxu0 0.0
      %1054 = vmatpush2.msra.mxu0 0.0
      %1055 = vmatprep.subr.mxu0 0.0
      %1056 = vmatpush2.msra.mxu0 0.0
      %1057 = vmatprep.subr.mxu0 0.0
      %1058 = vmatpush2.msra.mxu0 0.0
      %1059 = vmatprep.subr.mxu0 0.0
      %1060 = vmatpush2.msra.mxu0 0.0
      %1061 = vmatprep.subr.mxu0 0.0
      %1062 = vmatpush2.msra.mxu0 0.0
      %1063 = vmatprep.subr.mxu0 0.0
      %1064 = vmatpush2.msra.mxu0 0.0
      %1065 = vmatprep.subr.mxu0 0.0
      %1066 = vmatpush2.msra.mxu0 0.0
      %1067 = vmatprep.subr.mxu0 0.0
      %1068 = vmatpush2.msra.mxu0 0.0
      %1069 = vmatprep.subr.mxu0 0.0
      %1070 = vmatpush2.msra.mxu0 0.0
      %1071 = vmatprep.subr.mxu0 0.0
      %1072 = vmatpush2.msra.mxu0 0.0
      %1073 = vmatprep.subr.mxu0 0.0
      %1074 = vmatpush2.msra.mxu0 0.0
      %1075 = vmatprep.subr.mxu0 0.0
      %1076 = vmatpush2.msra.mxu0 0.0
      %1077 = vmatprep.mubr.f32.mxu0 0.0
      %1078 = vmatmul.mubr.f32.gmra.mxu0 %v1011
      %v1079 = vpop.f32.mrf.mxu0
      %v1080 = vadd.f32 0.0, %v1079
      %v1081 = vpop.f32.mrf.mxu0
      %v1082 = vadd.f32 0.0, %v1081
      %1083 = vdwg.mxu0
      %1084 = vmatprep.subr.mxu0 0.0
      %1085 = vmatpush1.msra.mxu0 0.0
      %1086 = vmatprep.subr.mxu0 0.0
      %1087 = vmatpush1.msra.mxu0 0.0
      %1088 = vmatprep.subr.mxu0 0.0
      %1089 = vmatpush1.msra.mxu0 0.0
      %1090 = vmatprep.subr.mxu0 0.0
      %1091 = vmatpush1.msra.mxu0 0.0
      %1092 = vmatprep.subr.mxu0 0.0
      %1093 = vmatpush1.msra.mxu0 0.0
      %1094 = vmatprep.subr.mxu0 0.0
      %1095 = vmatpush1.msra.mxu0 0.0
      %1096 = vmatprep.subr.mxu0 0.0
      %1097 = vmatpush1.msra.mxu0 0.0
      %1098 = vmatprep.subr.mxu0 0.0
      %1099 = vmatpush1.msra.mxu0 0.0
      %1100 = vmatprep.subr.mxu0 0.0
      %1101 = vmatpush1.msra.mxu0 0.0
      %1102 = vmatprep.subr.mxu0 0.0
      %1103 = vmatpush1.msra.mxu0 0.0
      %1104 = vmatprep.subr.mxu0 0.0
      %1105 = vmatpush1.msra.mxu0 0.0
      %1106 = vmatprep.subr.mxu0 0.0
      %1107 = vmatpush1.msra.mxu0 0.0
      %1108 = vmatprep.subr.mxu0 0.0
      %1109 = vmatpush1.msra.mxu0 0.0
      %1110 = vmatprep.subr.mxu0 0.0
      %1111 = vmatpush1.msra.mxu0 0.0
      %1112 = vmatprep.subr.mxu0 0.0
      %1113 = vmatpush1.msra.mxu0 0.0
      %1114 = vmatprep.subr.mxu0 0.0
      %1115 = vmatpush1.msra.mxu0 %v1006
      %1116 = vmatprep.subr.mxu0 0.0
      %1117 = vmatpush2.msra.mxu0 0.0
      %1118 = vmatprep.subr.mxu0 0.0
      %1119 = vmatpush2.msra.mxu0 0.0
      %1120 = vmatprep.subr.mxu0 0.0
      %1121 = vmatpush2.msra.mxu0 0.0
      %1122 = vmatprep.subr.mxu0 0.0
      %1123 = vmatpush2.msra.mxu0 0.0
      %1124 = vmatprep.subr.mxu0 0.0
      %1125 = vmatpush2.msra.mxu0 0.0
      %1126 = vmatprep.subr.mxu0 0.0
      %1127 = vmatpush2.msra.mxu0 0.0
      %1128 = vmatprep.subr.mxu0 0.0
      %1129 = vmatpush2.msra.mxu0 0.0
      %1130 = vmatprep.subr.mxu0 0.0
      %1131 = vmatpush2.msra.mxu0 0.0
      %1132 = vmatprep.subr.mxu0 0.0
      %1133 = vmatpush2.msra.mxu0 0.0
      %1134 = vmatprep.subr.mxu0 0.0
      %1135 = vmatpush2.msra.mxu0 0.0
      %1136 = vmatprep.subr.mxu0 0.0
      %1137 = vmatpush2.msra.mxu0 0.0
      %1138 = vmatprep.subr.mxu0 0.0
      %1139 = vmatpush2.msra.mxu0 0.0
      %1140 = vmatprep.subr.mxu0 0.0
      %1141 = vmatpush2.msra.mxu0 0.0
      %1142 = vmatprep.subr.mxu0 0.0
      %1143 = vmatpush2.msra.mxu0 0.0
      %1144 = vmatprep.subr.mxu0 0.0
      %1145 = vmatpush2.msra.mxu0 0.0
      %1146 = vmatprep.subr.mxu0 0.0
      %1147 = vmatpush2.msra.mxu0 0.0
      %1148 = vmatprep.mubr.f32.mxu0 0.0
      %1149 = vmatmul.mubr.f32.gmra.mxu0 %v1011
      %v1150 = vpop.f32.mrf.mxu0
      %v1151 = vadd.f32 0.0, %v1150
      %v1152 = vpop.f32.mrf.mxu0
      %1153 = vdwg.mxu0
      %v1154 = vadd.f32 %v990, %v1080
      %v1155 = vadd.f32 %v991, %v1082
      %v1156 = vadd.f32 %v992, %v1151
      %s1157 = scalar_lea.vmem %s1, 48
      %v1158 = vld [vmem:[%s1157] sm:$0xff]
      %1159 = vrot.lane.b32.xlu0 %v331, 92
      %v1160 = vpop.permute.xlu0 %1159
      %1161 = vrot.lane.b32.xlu0 %v332, 92
      %v1162 = vpop.permute.xlu0 %1161
      %1163 = vrot.lane.b32.xlu0 %v333, 92
      %v1164 = vpop.permute.xlu0 %1163
      %1165 = vrot.lane.b32.xlu0 %v334, 92
      %v1166 = vpop.permute.xlu0 %1165
      %vm1167 = vcmask 752640
      %v1168 = vsel %vm1167, %v1160, %v1162
      %v1169 = vsel %vm1167, %v1162, %v1164
      %v1170 = vsel %vm1167, %v1164, %v1166
      %v1175 = vsel %vm181, %v1158, 0
      %1177 = vmatprep.subr.mxu0 0.0
      %1178 = vmatpush1.msra.mxu0 0.0
      %1179 = vmatprep.subr.mxu0 0.0
      %1180 = vmatpush1.msra.mxu0 0.0
      %1181 = vmatprep.subr.mxu0 0.0
      %1182 = vmatpush1.msra.mxu0 0.0
      %1183 = vmatprep.subr.mxu0 0.0
      %1184 = vmatpush1.msra.mxu0 0.0
      %1185 = vmatprep.subr.mxu0 0.0
      %1186 = vmatpush1.msra.mxu0 0.0
      %1187 = vmatprep.subr.mxu0 0.0
      %1188 = vmatpush1.msra.mxu0 0.0
      %1189 = vmatprep.subr.mxu0 0.0
      %1190 = vmatpush1.msra.mxu0 0.0
      %1191 = vmatprep.subr.mxu0 0.0
      %1192 = vmatpush1.msra.mxu0 0.0
      %1193 = vmatprep.subr.mxu0 0.0
      %1194 = vmatpush1.msra.mxu0 0.0
      %1195 = vmatprep.subr.mxu0 0.0
      %1196 = vmatpush1.msra.mxu0 0.0
      %1197 = vmatprep.subr.mxu0 0.0
      %1198 = vmatpush1.msra.mxu0 0.0
      %1199 = vmatprep.subr.mxu0 0.0
      %1200 = vmatpush1.msra.mxu0 0.0
      %1201 = vmatprep.subr.mxu0 0.0
      %1202 = vmatpush1.msra.mxu0 0.0
      %1203 = vmatprep.subr.mxu0 0.0
      %1204 = vmatpush1.msra.mxu0 0.0
      %1205 = vmatprep.subr.mxu0 0.0
      %1206 = vmatpush1.msra.mxu0 0.0
      %1207 = vmatprep.subr.mxu0 %v1169
      %1208 = vmatpush1.msra.mxu0 %v1168
      %1209 = vmatprep.subr.mxu0 0.0
      %1210 = vmatpush2.msra.mxu0 0.0
      %1211 = vmatprep.subr.mxu0 0.0
      %1212 = vmatpush2.msra.mxu0 0.0
      %1213 = vmatprep.subr.mxu0 0.0
      %1214 = vmatpush2.msra.mxu0 0.0
      %1215 = vmatprep.subr.mxu0 0.0
      %1216 = vmatpush2.msra.mxu0 0.0
      %1217 = vmatprep.subr.mxu0 0.0
      %1218 = vmatpush2.msra.mxu0 0.0
      %1219 = vmatprep.subr.mxu0 0.0
      %1220 = vmatpush2.msra.mxu0 0.0
      %1221 = vmatprep.subr.mxu0 0.0
      %1222 = vmatpush2.msra.mxu0 0.0
      %1223 = vmatprep.subr.mxu0 0.0
      %1224 = vmatpush2.msra.mxu0 0.0
      %1225 = vmatprep.subr.mxu0 0.0
      %1226 = vmatpush2.msra.mxu0 0.0
      %1227 = vmatprep.subr.mxu0 0.0
      %1228 = vmatpush2.msra.mxu0 0.0
      %1229 = vmatprep.subr.mxu0 0.0
      %1230 = vmatpush2.msra.mxu0 0.0
      %1231 = vmatprep.subr.mxu0 0.0
      %1232 = vmatpush2.msra.mxu0 0.0
      %1233 = vmatprep.subr.mxu0 0.0
      %1234 = vmatpush2.msra.mxu0 0.0
      %1235 = vmatprep.subr.mxu0 0.0
      %1236 = vmatpush2.msra.mxu0 0.0
      %1237 = vmatprep.subr.mxu0 0.0
      %1238 = vmatpush2.msra.mxu0 0.0
      %1239 = vmatprep.subr.mxu0 0.0
      %1240 = vmatpush2.msra.mxu0 0.0
      %1241 = vmatprep.mubr.f32.mxu0 0.0
      %1242 = vmatmul.mubr.f32.gmra.mxu0 %v1175
      %v1243 = vpop.f32.mrf.mxu0
      %v1244 = vadd.f32 0.0, %v1243
      %v1245 = vpop.f32.mrf.mxu0
      %v1246 = vadd.f32 0.0, %v1245
      %1247 = vdwg.mxu0
      %1248 = vmatprep.subr.mxu0 0.0
      %1249 = vmatpush1.msra.mxu0 0.0
      %1250 = vmatprep.subr.mxu0 0.0
      %1251 = vmatpush1.msra.mxu0 0.0
      %1252 = vmatprep.subr.mxu0 0.0
      %1253 = vmatpush1.msra.mxu0 0.0
      %1254 = vmatprep.subr.mxu0 0.0
      %1255 = vmatpush1.msra.mxu0 0.0
      %1256 = vmatprep.subr.mxu0 0.0
      %1257 = vmatpush1.msra.mxu0 0.0
      %1258 = vmatprep.subr.mxu0 0.0
      %1259 = vmatpush1.msra.mxu0 0.0
      %1260 = vmatprep.subr.mxu0 0.0
      %1261 = vmatpush1.msra.mxu0 0.0
      %1262 = vmatprep.subr.mxu0 0.0
      %1263 = vmatpush1.msra.mxu0 0.0
      %1264 = vmatprep.subr.mxu0 0.0
      %1265 = vmatpush1.msra.mxu0 0.0
      %1266 = vmatprep.subr.mxu0 0.0
      %1267 = vmatpush1.msra.mxu0 0.0
      %1268 = vmatprep.subr.mxu0 0.0
      %1269 = vmatpush1.msra.mxu0 0.0
      %1270 = vmatprep.subr.mxu0 0.0
      %1271 = vmatpush1.msra.mxu0 0.0
      %1272 = vmatprep.subr.mxu0 0.0
      %1273 = vmatpush1.msra.mxu0 0.0
      %1274 = vmatprep.subr.mxu0 0.0
      %1275 = vmatpush1.msra.mxu0 0.0
      %1276 = vmatprep.subr.mxu0 0.0
      %1277 = vmatpush1.msra.mxu0 0.0
      %1278 = vmatprep.subr.mxu0 0.0
      %1279 = vmatpush1.msra.mxu0 %v1170
      %1280 = vmatprep.subr.mxu0 0.0
      %1281 = vmatpush2.msra.mxu0 0.0
      %1282 = vmatprep.subr.mxu0 0.0
      %1283 = vmatpush2.msra.mxu0 0.0
      %1284 = vmatprep.subr.mxu0 0.0
      %1285 = vmatpush2.msra.mxu0 0.0
      %1286 = vmatprep.subr.mxu0 0.0
      %1287 = vmatpush2.msra.mxu0 0.0
      %1288 = vmatprep.subr.mxu0 0.0
      %1289 = vmatpush2.msra.mxu0 0.0
      %1290 = vmatprep.subr.mxu0 0.0
      %1291 = vmatpush2.msra.mxu0 0.0
      %1292 = vmatprep.subr.mxu0 0.0
      %1293 = vmatpush2.msra.mxu0 0.0
      %1294 = vmatprep.subr.mxu0 0.0
      %1295 = vmatpush2.msra.mxu0 0.0
      %1296 = vmatprep.subr.mxu0 0.0
      %1297 = vmatpush2.msra.mxu0 0.0
      %1298 = vmatprep.subr.mxu0 0.0
      %1299 = vmatpush2.msra.mxu0 0.0
      %1300 = vmatprep.subr.mxu0 0.0
      %1301 = vmatpush2.msra.mxu0 0.0
      %1302 = vmatprep.subr.mxu0 0.0
      %1303 = vmatpush2.msra.mxu0 0.0
      %1304 = vmatprep.subr.mxu0 0.0
      %1305 = vmatpush2.msra.mxu0 0.0
      %1306 = vmatprep.subr.mxu0 0.0
      %1307 = vmatpush2.msra.mxu0 0.0
      %1308 = vmatprep.subr.mxu0 0.0
      %1309 = vmatpush2.msra.mxu0 0.0
      %1310 = vmatprep.subr.mxu0 0.0
      %1311 = vmatpush2.msra.mxu0 0.0
      %1312 = vmatprep.mubr.f32.mxu0 0.0
      %1313 = vmatmul.mubr.f32.gmra.mxu0 %v1175
      %v1314 = vpop.f32.mrf.mxu0
      %v1315 = vadd.f32 0.0, %v1314
      %v1316 = vpop.f32.mrf.mxu0
      %1317 = vdwg.mxu0
      %v1318 = vadd.f32 %v1154, %v1244
      %v1319 = vadd.f32 %v1155, %v1246
      %v1320 = vadd.f32 %v1156, %v1315
      %s1321 = scalar_lea.vmem %s1, 56
      %v1322 = vld [vmem:[%s1321] sm:$0xff]
      %1323 = vrot.lane.b32.xlu0 %v331, 91
      %v1324 = vpop.permute.xlu0 %1323
      %1325 = vrot.lane.b32.xlu0 %v332, 91
      %v1326 = vpop.permute.xlu0 %1325
      %1327 = vrot.lane.b32.xlu0 %v333, 91
      %v1328 = vpop.permute.xlu0 %1327
      %1329 = vrot.lane.b32.xlu0 %v334, 91
      %v1330 = vpop.permute.xlu0 %1329
      %vm1331 = vcmask 744448
      %v1332 = vsel %vm1331, %v1324, %v1326
      %v1333 = vsel %vm1331, %v1326, %v1328
      %v1334 = vsel %vm1331, %v1328, %v1330
      %v1339 = vsel %vm181, %v1322, 0
      %1341 = vmatprep.subr.mxu0 0.0
      %1342 = vmatpush1.msra.mxu0 0.0
      %1343 = vmatprep.subr.mxu0 0.0
      %1344 = vmatpush1.msra.mxu0 0.0
      %1345 = vmatprep.subr.mxu0 0.0
      %1346 = vmatpush1.msra.mxu0 0.0
      %1347 = vmatprep.subr.mxu0 0.0
      %1348 = vmatpush1.msra.mxu0 0.0
      %1349 = vmatprep.subr.mxu0 0.0
      %1350 = vmatpush1.msra.mxu0 0.0
      %1351 = vmatprep.subr.mxu0 0.0
      %1352 = vmatpush1.msra.mxu0 0.0
      %1353 = vmatprep.subr.mxu0 0.0
      %1354 = vmatpush1.msra.mxu0 0.0
      %1355 = vmatprep.subr.mxu0 0.0
      %1356 = vmatpush1.msra.mxu0 0.0
      %1357 = vmatprep.subr.mxu0 0.0
      %1358 = vmatpush1.msra.mxu0 0.0
      %1359 = vmatprep.subr.mxu0 0.0
      %1360 = vmatpush1.msra.mxu0 0.0
      %1361 = vmatprep.subr.mxu0 0.0
      %1362 = vmatpush1.msra.mxu0 0.0
      %1363 = vmatprep.subr.mxu0 0.0
      %1364 = vmatpush1.msra.mxu0 0.0
      %1365 = vmatprep.subr.mxu0 0.0
      %1366 = vmatpush1.msra.mxu0 0.0
      %1367 = vmatprep.subr.mxu0 0.0
      %1368 = vmatpush1.msra.mxu0 0.0
      %1369 = vmatprep.subr.mxu0 0.0
      %1370 = vmatpush1.msra.mxu0 0.0
      %1371 = vmatprep.subr.mxu0 %v1333
      %1372 = vmatpush1.msra.mxu0 %v1332
      %1373 = vmatprep.subr.mxu0 0.0
      %1374 = vmatpush2.msra.mxu0 0.0
      %1375 = vmatprep.subr.mxu0 0.0
      %1376 = vmatpush2.msra.mxu0 0.0
      %1377 = vmatprep.subr.mxu0 0.0
      %1378 = vmatpush2.msra.mxu0 0.0
      %1379 = vmatprep.subr.mxu0 0.0
      %1380 = vmatpush2.msra.mxu0 0.0
      %1381 = vmatprep.subr.mxu0 0.0
      %1382 = vmatpush2.msra.mxu0 0.0
      %1383 = vmatprep.subr.mxu0 0.0
      %1384 = vmatpush2.msra.mxu0 0.0
      %1385 = vmatprep.subr.mxu0 0.0
      %1386 = vmatpush2.msra.mxu0 0.0
      %1387 = vmatprep.subr.mxu0 0.0
      %1388 = vmatpush2.msra.mxu0 0.0
      %1389 = vmatprep.subr.mxu0 0.0
      %1390 = vmatpush2.msra.mxu0 0.0
      %1391 = vmatprep.subr.mxu0 0.0
      %1392 = vmatpush2.msra.mxu0 0.0
      %1393 = vmatprep.subr.mxu0 0.0
      %1394 = vmatpush2.msra.mxu0 0.0
      %1395 = vmatprep.subr.mxu0 0.0
      %1396 = vmatpush2.msra.mxu0 0.0
      %1397 = vmatprep.subr.mxu0 0.0
      %1398 = vmatpush2.msra.mxu0 0.0
      %1399 = vmatprep.subr.mxu0 0.0
      %1400 = vmatpush2.msra.mxu0 0.0
      %1401 = vmatprep.subr.mxu0 0.0
      %1402 = vmatpush2.msra.mxu0 0.0
      %1403 = vmatprep.subr.mxu0 0.0
      %1404 = vmatpush2.msra.mxu0 0.0
      %1405 = vmatprep.mubr.f32.mxu0 0.0
      %1406 = vmatmul.mubr.f32.gmra.mxu0 %v1339
      %v1407 = vpop.f32.mrf.mxu0
      %v1408 = vadd.f32 0.0, %v1407
      %v1409 = vpop.f32.mrf.mxu0
      %v1410 = vadd.f32 0.0, %v1409
      %1411 = vdwg.mxu0
      %1412 = vmatprep.subr.mxu0 0.0
      %1413 = vmatpush1.msra.mxu0 0.0
      %1414 = vmatprep.subr.mxu0 0.0
      %1415 = vmatpush1.msra.mxu0 0.0
      %1416 = vmatprep.subr.mxu0 0.0
      %1417 = vmatpush1.msra.mxu0 0.0
      %1418 = vmatprep.subr.mxu0 0.0
      %1419 = vmatpush1.msra.mxu0 0.0
      %1420 = vmatprep.subr.mxu0 0.0
      %1421 = vmatpush1.msra.mxu0 0.0
      %1422 = vmatprep.subr.mxu0 0.0
      %1423 = vmatpush1.msra.mxu0 0.0
      %1424 = vmatprep.subr.mxu0 0.0
      %1425 = vmatpush1.msra.mxu0 0.0
      %1426 = vmatprep.subr.mxu0 0.0
      %1427 = vmatpush1.msra.mxu0 0.0
      %1428 = vmatprep.subr.mxu0 0.0
      %1429 = vmatpush1.msra.mxu0 0.0
      %1430 = vmatprep.subr.mxu0 0.0
      %1431 = vmatpush1.msra.mxu0 0.0
      %1432 = vmatprep.subr.mxu0 0.0
      %1433 = vmatpush1.msra.mxu0 0.0
      %1434 = vmatprep.subr.mxu0 0.0
      %1435 = vmatpush1.msra.mxu0 0.0
      %1436 = vmatprep.subr.mxu0 0.0
      %1437 = vmatpush1.msra.mxu0 0.0
      %1438 = vmatprep.subr.mxu0 0.0
      %1439 = vmatpush1.msra.mxu0 0.0
      %1440 = vmatprep.subr.mxu0 0.0
      %1441 = vmatpush1.msra.mxu0 0.0
      %1442 = vmatprep.subr.mxu0 0.0
      %1443 = vmatpush1.msra.mxu0 %v1334
      %1444 = vmatprep.subr.mxu0 0.0
      %1445 = vmatpush2.msra.mxu0 0.0
      %1446 = vmatprep.subr.mxu0 0.0
      %1447 = vmatpush2.msra.mxu0 0.0
      %1448 = vmatprep.subr.mxu0 0.0
      %1449 = vmatpush2.msra.mxu0 0.0
      %1450 = vmatprep.subr.mxu0 0.0
      %1451 = vmatpush2.msra.mxu0 0.0
      %1452 = vmatprep.subr.mxu0 0.0
      %1453 = vmatpush2.msra.mxu0 0.0
      %1454 = vmatprep.subr.mxu0 0.0
      %1455 = vmatpush2.msra.mxu0 0.0
      %1456 = vmatprep.subr.mxu0 0.0
      %1457 = vmatpush2.msra.mxu0 0.0
      %1458 = vmatprep.subr.mxu0 0.0
      %1459 = vmatpush2.msra.mxu0 0.0
      %1460 = vmatprep.subr.mxu0 0.0
      %1461 = vmatpush2.msra.mxu0 0.0
      %1462 = vmatprep.subr.mxu0 0.0
      %1463 = vmatpush2.msra.mxu0 0.0
      %1464 = vmatprep.subr.mxu0 0.0
      %1465 = vmatpush2.msra.mxu0 0.0
      %1466 = vmatprep.subr.mxu0 0.0
      %1467 = vmatpush2.msra.mxu0 0.0
      %1468 = vmatprep.subr.mxu0 0.0
      %1469 = vmatpush2.msra.mxu0 0.0
      %1470 = vmatprep.subr.mxu0 0.0
      %1471 = vmatpush2.msra.mxu0 0.0
      %1472 = vmatprep.subr.mxu0 0.0
      %1473 = vmatpush2.msra.mxu0 0.0
      %1474 = vmatprep.subr.mxu0 0.0
      %1475 = vmatpush2.msra.mxu0 0.0
      %1476 = vmatprep.mubr.f32.mxu0 0.0
      %1477 = vmatmul.mubr.f32.gmra.mxu0 %v1339
      %v1478 = vpop.f32.mrf.mxu0
      %v1479 = vadd.f32 0.0, %v1478
      %v1480 = vpop.f32.mrf.mxu0
      %1481 = vdwg.mxu0
      %v1482 = vadd.f32 %v1318, %v1408
      %v1483 = vadd.f32 %v1319, %v1410
      %v1484 = vadd.f32 %v1320, %v1479
      %s1485 = scalar_lea.vmem %s1, 64
      %v1486 = vld [vmem:[%s1485] sm:$0xff]
      %1487 = vrot.lane.b32.xlu0 %v331, 90
      %v1488 = vpop.permute.xlu0 %1487
      %1489 = vrot.lane.b32.xlu0 %v332, 90
      %v1490 = vpop.permute.xlu0 %1489
      %1491 = vrot.lane.b32.xlu0 %v333, 90
      %v1492 = vpop.permute.xlu0 %1491
      %1493 = vrot.lane.b32.xlu0 %v334, 90
      %v1494 = vpop.permute.xlu0 %1493
      %vm1495 = vcmask 736256
      %v1496 = vsel %vm1495, %v1488, %v1490
      %v1497 = vsel %vm1495, %v1490, %v1492
      %v1498 = vsel %vm1495, %v1492, %v1494
      %v1503 = vsel %vm181, %v1486, 0
      %1505 = vmatprep.subr.mxu0 0.0
      %1506 = vmatpush1.msra.mxu0 0.0
      %1507 = vmatprep.subr.mxu0 0.0
      %1508 = vmatpush1.msra.mxu0 0.0
      %1509 = vmatprep.subr.mxu0 0.0
      %1510 = vmatpush1.msra.mxu0 0.0
      %1511 = vmatprep.subr.mxu0 0.0
      %1512 = vmatpush1.msra.mxu0 0.0
      %1513 = vmatprep.subr.mxu0 0.0
      %1514 = vmatpush1.msra.mxu0 0.0
      %1515 = vmatprep.subr.mxu0 0.0
      %1516 = vmatpush1.msra.mxu0 0.0
      %1517 = vmatprep.subr.mxu0 0.0
      %1518 = vmatpush1.msra.mxu0 0.0
      %1519 = vmatprep.subr.mxu0 0.0
      %1520 = vmatpush1.msra.mxu0 0.0
      %1521 = vmatprep.subr.mxu0 0.0
      %1522 = vmatpush1.msra.mxu0 0.0
      %1523 = vmatprep.subr.mxu0 0.0
      %1524 = vmatpush1.msra.mxu0 0.0
      %1525 = vmatprep.subr.mxu0 0.0
      %1526 = vmatpush1.msra.mxu0 0.0
      %1527 = vmatprep.subr.mxu0 0.0
      %1528 = vmatpush1.msra.mxu0 0.0
      %1529 = vmatprep.subr.mxu0 0.0
      %1530 = vmatpush1.msra.mxu0 0.0
      %1531 = vmatprep.subr.mxu0 0.0
      %1532 = vmatpush1.msra.mxu0 0.0
      %1533 = vmatprep.subr.mxu0 0.0
      %1534 = vmatpush1.msra.mxu0 0.0
      %1535 = vmatprep.subr.mxu0 %v1497
      %1536 = vmatpush1.msra.mxu0 %v1496
      %1537 = vmatprep.subr.mxu0 0.0
      %1538 = vmatpush2.msra.mxu0 0.0
      %1539 = vmatprep.subr.mxu0 0.0
      %1540 = vmatpush2.msra.mxu0 0.0
      %1541 = vmatprep.subr.mxu0 0.0
      %1542 = vmatpush2.msra.mxu0 0.0
      %1543 = vmatprep.subr.mxu0 0.0
      %1544 = vmatpush2.msra.mxu0 0.0
      %1545 = vmatprep.subr.mxu0 0.0
      %1546 = vmatpush2.msra.mxu0 0.0
      %1547 = vmatprep.subr.mxu0 0.0
      %1548 = vmatpush2.msra.mxu0 0.0
      %1549 = vmatprep.subr.mxu0 0.0
      %1550 = vmatpush2.msra.mxu0 0.0
      %1551 = vmatprep.subr.mxu0 0.0
      %1552 = vmatpush2.msra.mxu0 0.0
      %1553 = vmatprep.subr.mxu0 0.0
      %1554 = vmatpush2.msra.mxu0 0.0
      %1555 = vmatprep.subr.mxu0 0.0
      %1556 = vmatpush2.msra.mxu0 0.0
      %1557 = vmatprep.subr.mxu0 0.0
      %1558 = vmatpush2.msra.mxu0 0.0
      %1559 = vmatprep.subr.mxu0 0.0
      %1560 = vmatpush2.msra.mxu0 0.0
      %1561 = vmatprep.subr.mxu0 0.0
      %1562 = vmatpush2.msra.mxu0 0.0
      %1563 = vmatprep.subr.mxu0 0.0
      %1564 = vmatpush2.msra.mxu0 0.0
      %1565 = vmatprep.subr.mxu0 0.0
      %1566 = vmatpush2.msra.mxu0 0.0
      %1567 = vmatprep.subr.mxu0 0.0
      %1568 = vmatpush2.msra.mxu0 0.0
      %1569 = vmatprep.mubr.f32.mxu0 0.0
      %1570 = vmatmul.mubr.f32.gmra.mxu0 %v1503
      %v1571 = vpop.f32.mrf.mxu0
      %v1572 = vadd.f32 0.0, %v1571
      %v1573 = vpop.f32.mrf.mxu0
      %v1574 = vadd.f32 0.0, %v1573
      %1575 = vdwg.mxu0
      %1576 = vmatprep.subr.mxu0 0.0
      %1577 = vmatpush1.msra.mxu0 0.0
      %1578 = vmatprep.subr.mxu0 0.0
      %1579 = vmatpush1.msra.mxu0 0.0
      %1580 = vmatprep.subr.mxu0 0.0
      %1581 = vmatpush1.msra.mxu0 0.0
      %1582 = vmatprep.subr.mxu0 0.0
      %1583 = vmatpush1.msra.mxu0 0.0
      %1584 = vmatprep.subr.mxu0 0.0
      %1585 = vmatpush1.msra.mxu0 0.0
      %1586 = vmatprep.subr.mxu0 0.0
      %1587 = vmatpush1.msra.mxu0 0.0
      %1588 = vmatprep.subr.mxu0 0.0
      %1589 = vmatpush1.msra.mxu0 0.0
      %1590 = vmatprep.subr.mxu0 0.0
      %1591 = vmatpush1.msra.mxu0 0.0
      %1592 = vmatprep.subr.mxu0 0.0
      %1593 = vmatpush1.msra.mxu0 0.0
      %1594 = vmatprep.subr.mxu0 0.0
      %1595 = vmatpush1.msra.mxu0 0.0
      %1596 = vmatprep.subr.mxu0 0.0
      %1597 = vmatpush1.msra.mxu0 0.0
      %1598 = vmatprep.subr.mxu0 0.0
      %1599 = vmatpush1.msra.mxu0 0.0
      %1600 = vmatprep.subr.mxu0 0.0
      %1601 = vmatpush1.msra.mxu0 0.0
      %1602 = vmatprep.subr.mxu0 0.0
      %1603 = vmatpush1.msra.mxu0 0.0
      %1604 = vmatprep.subr.mxu0 0.0
      %1605 = vmatpush1.msra.mxu0 0.0
      %1606 = vmatprep.subr.mxu0 0.0
      %1607 = vmatpush1.msra.mxu0 %v1498
      %1608 = vmatprep.subr.mxu0 0.0
      %1609 = vmatpush2.msra.mxu0 0.0
      %1610 = vmatprep.subr.mxu0 0.0
      %1611 = vmatpush2.msra.mxu0 0.0
      %1612 = vmatprep.subr.mxu0 0.0
      %1613 = vmatpush2.msra.mxu0 0.0
      %1614 = vmatprep.subr.mxu0 0.0
      %1615 = vmatpush2.msra.mxu0 0.0
      %1616 = vmatprep.subr.mxu0 0.0
      %1617 = vmatpush2.msra.mxu0 0.0
      %1618 = vmatprep.subr.mxu0 0.0
      %1619 = vmatpush2.msra.mxu0 0.0
      %1620 = vmatprep.subr.mxu0 0.0
      %1621 = vmatpush2.msra.mxu0 0.0
      %1622 = vmatprep.subr.mxu0 0.0
      %1623 = vmatpush2.msra.mxu0 0.0
      %1624 = vmatprep.subr.mxu0 0.0
      %1625 = vmatpush2.msra.mxu0 0.0
      %1626 = vmatprep.subr.mxu0 0.0
      %1627 = vmatpush2.msra.mxu0 0.0
      %1628 = vmatprep.subr.mxu0 0.0
      %1629 = vmatpush2.msra.mxu0 0.0
      %1630 = vmatprep.subr.mxu0 0.0
      %1631 = vmatpush2.msra.mxu0 0.0
      %1632 = vmatprep.subr.mxu0 0.0
      %1633 = vmatpush2.msra.mxu0 0.0
      %1634 = vmatprep.subr.mxu0 0.0
      %1635 = vmatpush2.msra.mxu0 0.0
      %1636 = vmatprep.subr.mxu0 0.0
      %1637 = vmatpush2.msra.mxu0 0.0
      %1638 = vmatprep.subr.mxu0 0.0
      %1639 = vmatpush2.msra.mxu0 0.0
      %1640 = vmatprep.mubr.f32.mxu0 0.0
      %1641 = vmatmul.mubr.f32.gmra.mxu0 %v1503
      %v1642 = vpop.f32.mrf.mxu0
      %v1643 = vadd.f32 0.0, %v1642
      %v1644 = vpop.f32.mrf.mxu0
      %1645 = vdwg.mxu0
      %v1646 = vadd.f32 %v1482, %v1572
      %v1647 = vadd.f32 %v1483, %v1574
      %v1648 = vadd.f32 %v1484, %v1643
      %v1649 = vmax.f32 %v1646, 0.0
      %v1650 = vmax.f32 %v1647, 0.0
      %v1651 = vmax.f32 %v1648, 0.0
      %1652 = vst [vmem:[%s170] sm:$0xff] %v1649
      %1653 = vst [vmem:[%s170 + $0x8] sm:$0xff] %v1650
      %1654 = vst [vmem:[%s170 + $0x10] sm:$0xff] %v1651
      %p1655 = scmp.lt.s32.totalorder %s14, 1
      %s1656 = scalar_select %p1655, %s14, 1
      %s1657 = smul.addr %s1656, 3
      %s1658 = smul.addr %s1657, 8
      %s1659 = scalar_lea.vmem %s3, %s1658
      // Predicated region
      $region33: #{basic_conv_forward.1} parent=31 // pred_check
        %p1660 = pneg %p100
      $region34: #{basic_conv_forward.1} parent=31 // pred_check_branch
        %1662 = sbr.rel (%p1660) target = $region36
      $region35: #{basic_conv_forward.1} parent=31 // pred_region
        _
      $region36: #{basic_conv_forward.1} parent=31 // pred_fallthru
        _
    $region32: #{basic_conv_forward.1} parent=5 // pred_fallthru
      _
    %p1663 = scmp.le.s32.totalorder 2, %s9
    // Predicated region
    $region37: #{basic_conv_forward.1} parent=5 // pred_check
      %p1664 = pneg %p1663
    $region38: #{basic_conv_forward.1} parent=5 // pred_check_branch
      %1666 = sbr.rel (%p1664) target = $region40
    $region39: #{basic_conv_forward.1} parent=5 // pred_region
      %s1667 = ssub.s32 %s9, 2
      // Predicated region
      $region41: #{basic_conv_forward.1} parent=39 // pred_check
        %p1668 = pneg %p106
      $region42: #{basic_conv_forward.1} parent=39 // pred_check_branch
        %1670 = sbr.rel (%p1668) target = $region44
      $region43: #{basic_conv_forward.1} parent=39 // pred_region
        %p1671 = scmp.lt.s32.totalorder %s15, 1
        %s1672 = scalar_select %p1671, %s15, 1
        %s1673 = smul.addr %s1672, 3
        %s1674 = smul.addr %s1673, 8
        %s1675 = scalar_lea.vmem %s3, %s1674
      $region44: #{basic_conv_forward.1} parent=39 // pred_fallthru
        _
    $region40: #{basic_conv_forward.1} parent=5 // pred_fallthru
      _
  $region6: #{basic_conv_forward.1} parent=0 // loop_footer
    %s13 = sadd.s32 1, %s9
  $region7: #{basic_conv_forward.1} parent=0 // loop_footer_branch
    %8 = sbr.rel target = $region3
  $region8: #{basic_conv_forward.1} parent=0 // loop_exit
    _

</llo_original>
